<compile_context>
chip_gen: v6e
topology: v6e:2x2x1
jax: 0.10.0
libtpu: 0.0.40
codegen_flags: <defaults>
</compile_context>

<pallas_src>
import functools
import math

import numpy as np
import jax
import jax.numpy as jnp
from jax.experimental import pallas as pl
from jax.experimental.pallas import tpu as pltpu


# ----------------------------------------------------------------------------
# configuration (small shapes consistent with the module)
# ----------------------------------------------------------------------------
B = 2
H = W = 8                 # input_resolution
DIM = 32                  # C (must be even)
OUT_DIM = 16              # out_dim (divisible by 4 for the sin-pos embedding)
EPS = 1e-5                # nn.LayerNorm default


# ----------------------------------------------------------------------------
# host-side (init-time) constants
# ----------------------------------------------------------------------------
def _bilinear_weight_matrix_1d(n):
    """1-D 2x bilinear upsample stencil, PyTorch align_corners=False."""
    out = 2 * n
    u = np.zeros((out, n), dtype=np.float64)
    for d in range(out):
        src = (d + 0.5) * 0.5 - 0.5          # source coordinate
        src = max(src, 0.0)                  # PyTorch clamps negative coords
        i0 = min(int(np.floor(src)), n - 1)
        i1 = min(i0 + 1, n - 1)
        lam = src - i0
        u[d, i0] += 1.0 - lam
        u[d, i1] += lam
    return u


def _bilinear_upsample_matrix_2d(h, w):
    """(4hw, hw) matrix: flattened (y*2W+x) <- flattened (h*W+w)."""
    return np.kron(_bilinear_weight_matrix_1d(h), _bilinear_weight_matrix_1d(w))


def _sinusoidal_grid2d(h, w, out_dim):
    """SinusoidalPositionalEmbedding(out_dim//2, padding_idx=0).make_grid2d(h, w)
    flattened to (h*w, out_dim) in (row-major y*w+x, channel) layout."""
    emb_dim = out_dim // 2
    half = emb_dim // 2
    denom = max(half - 1, 1)                            # div_half_dim=False
    freq = np.exp(np.arange(half, dtype=np.float64) * -(math.log(10000.0) / denom))

    def emb1d(n):                                        # positions 1..n
        pos = np.arange(1, n + 1, dtype=np.float64)[:, None]
        ang = pos * freq[None, :]
        return np.concatenate([np.sin(ang), np.cos(ang)], axis=1)  # (n, emb_dim)

    x_emb = emb1d(w)                                     # (w, emb_dim)
    y_emb = emb1d(h)                                     # (h, emb_dim)
    x_grid = np.broadcast_to(x_emb[None, :, :], (h, w, emb_dim))
    y_grid = np.broadcast_to(y_emb[:, None, :], (h, w, emb_dim))
    grid = np.concatenate([x_grid, y_grid], axis=-1)     # (h, w, out_dim)
    return grid.reshape(h * w, out_dim)


# ----------------------------------------------------------------------------
# Pallas kernel: whole forward for one batch element, fully VMEM-resident
# ----------------------------------------------------------------------------
def _bilinear_upsample_kernel(x_ref, up_ref, g_ref, beta_ref, w_ref, pos_ref,
                              alpha_ref, o_ref, *, eps):
    x = x_ref[0]                                                         # (HW, C)
    # 2x bilinear upsample == precomputed interpolation matrix @ x     (MXU)
    up = jnp.dot(up_ref[...], x, preferred_element_type=jnp.float32)    # (4HW, C)
    # LayerNorm over channels (f32 VPU; rsqrt on the EUP slot)
    mu = jnp.mean(up, axis=-1, keepdims=True)
    var = jnp.mean(jnp.square(up - mu), axis=-1, keepdims=True)
    y = (up - mu) * jax.lax.rsqrt(var + eps) * g_ref[...] + beta_ref[...]
    # channel reduction: Linear(dim, out_dim, bias=False)               (MXU)
    y = jnp.dot(y, w_ref[...], preferred_element_type=jnp.float32)      # (4HW, out_dim)
    # + alpha * sinusoidal positional embedding grid (fused into the store)
    alpha = alpha_ref[0, 0]
    o_ref[0] = y + alpha * pos_ref[...]


def bilinear_upsample(x, params):
    b, l, c = x.shape
    assert l == H * W and c == DIM
    l4 = 4 * l
    out_dim = params["reduction_w"].shape[1]
    kern = functools.partial(_bilinear_upsample_kernel, eps=EPS)
    full = lambda i: (0, 0)

    # advisory cost hint for the XLA scheduler around the custom call
    flops = b * (2 * l4 * l * c + 2 * l4 * c * out_dim)
    transcendentals = b * l4                                  # one rsqrt per row
    bytes_accessed = 4 * (x.size + params["upsample_mat"].size
                          + params["norm_g"].size + params["norm_b"].size
                          + params["reduction_w"].size + params["pos_grid"].size
                          + params["alpha"].size + b * l4 * out_dim)

    return pl.pallas_call(
        kern,
        out_shape=jax.ShapeDtypeStruct((b, l4, out_dim), jnp.float32),
        grid=(b,),
        in_specs=[
            pl.BlockSpec((1, l, c), lambda i: (i, 0, 0)),     # x (per batch)
            pl.BlockSpec((l4, l), full),                      # upsample matrix
            pl.BlockSpec((1, c), full),                       # LN gamma
            pl.BlockSpec((1, c), full),                       # LN beta
            pl.BlockSpec((c, out_dim), full),                 # reduction weight (C, out_dim)
            pl.BlockSpec((l4, out_dim), full),                # sin-pos grid
            pl.BlockSpec((1, 1), full),                       # alpha (scalar)
        ],
        out_specs=pl.BlockSpec((1, l4, out_dim), lambda i: (i, 0, 0)),
        compiler_params=pltpu.CompilerParams(
            dimension_semantics=("parallel",)),               # v7x: 1 batch / core
        cost_estimate=pl.CostEstimate(flops=flops,
                                      transcendentals=transcendentals,
                                      bytes_accessed=bytes_accessed),
    )(x, params["upsample_mat"], params["norm_g"], params["norm_b"],
      params["reduction_w"], params["pos_grid"], params["alpha"])


# ----------------------------------------------------------------------------
# pure-JAX reference (same math) for a sanity check
# ----------------------------------------------------------------------------
def reference_forward(x, params):
    up = jnp.einsum("pl,blc->bpc", params["upsample_mat"], x,
                    precision=jax.lax.Precision.HIGHEST)
    mu = jnp.mean(up, axis=-1, keepdims=True)
    var = jnp.mean(jnp.square(up - mu), axis=-1, keepdims=True)
    y = (up - mu) * jax.lax.rsqrt(var + EPS) * params["norm_g"][0] + params["norm_b"][0]
    y = jnp.einsum("bpc,cd->bpd", y, params["reduction_w"],
                   precision=jax.lax.Precision.HIGHEST)
    return y + params["alpha"][0, 0] * params["pos_grid"][None]


# ----------------------------------------------------------------------------
# deterministic parameter init
# ----------------------------------------------------------------------------
def init_params(key):
    ks = jax.random.split(key, 4)
    nrm = lambda k, shp, s: (s * jax.random.normal(k, shp)).astype(jnp.float32)
    return {
        "norm_g": (1.0 + nrm(ks[0], (1, DIM), 0.1)).astype(jnp.float32),
        "norm_b": nrm(ks[1], (1, DIM), 0.1),
        # PyTorch Linear weight is (out_dim, dim); stored here pre-transposed.
        "reduction_w": nrm(ks[2], (DIM, OUT_DIM), 0.02),
        # PyTorch inits alpha = 0; use a small nonzero value so the
        # positional-embedding path is exercised.
        "alpha": nrm(ks[3], (1, 1), 0.1),
        # input-independent constants, hoisted out of the jitted forward:
        "upsample_mat": jnp.asarray(_bilinear_upsample_matrix_2d(H, W),
                                    dtype=jnp.float32),                 # (4HW, HW)
        "pos_grid": jnp.asarray(_sinusoidal_grid2d(2 * H, 2 * W, OUT_DIM),
                                dtype=jnp.float32),                     # (4HW, out_dim)
    }


if __name__ == "__main__":
    key = jax.random.PRNGKey(0)
    pkey, xkey = jax.random.split(key)
    params = init_params(pkey)
    x = jax.random.normal(xkey, (B, H * W, DIM), dtype=jnp.float32)

    out = jax.block_until_ready(jax.jit(bilinear_upsample)(x, params))

    assert out.shape == (B, 4 * H * W, OUT_DIM), out.shape
    assert bool(jnp.all(jnp.isfinite(out)))

    ref = jax.block_until_ready(jax.jit(reference_forward)(x, params))
    np.testing.assert_allclose(np.asarray(out), np.asarray(ref),
                               rtol=1e-2, atol=1e-2)

    print("KERNEL_OK")
</pallas_src>

<mosaic_0001>
module attributes {stable_mosaic.version = 11 : i64} {
  func.func @_bilinear_upsample_kernel(%arg0: i32, %arg1: memref<1x64x32xf32, #tpu.memory_space<vmem>>, %arg2: memref<256x64xf32, #tpu.memory_space<vmem>>, %arg3: memref<1x32xf32, #tpu.memory_space<vmem>>, %arg4: memref<1x32xf32, #tpu.memory_space<vmem>>, %arg5: memref<32x16xf32, #tpu.memory_space<vmem>>, %arg6: memref<256x16xf32, #tpu.memory_space<vmem>>, %arg7: memref<1x1xf32, #tpu.memory_space<vmem>>, %arg8: memref<1x256x16xf32, #tpu.memory_space<vmem>>) attributes {dimension_semantics = [#tpu.dimension_semantics<parallel>], iteration_bounds = array<i64: 2>, scalar_prefetch = 0 : i64, scratch_operands = 0 : i64, tpu.core_type = #tpu.core_type<tc>, window_params = [{transform_indices = @transform_0, window_bounds = array<i64: 1, 64, 32>}, {pipeline_mode = #tpu.pipeline_mode<synchronous>, transform_indices = @transform_1, window_bounds = array<i64: 256, 64>}, {pipeline_mode = #tpu.pipeline_mode<synchronous>, transform_indices = @transform_2, window_bounds = array<i64: 1, 32>}, {pipeline_mode = #tpu.pipeline_mode<synchronous>, transform_indices = @transform_3, window_bounds = array<i64: 1, 32>}, {pipeline_mode = #tpu.pipeline_mode<synchronous>, transform_indices = @transform_4, window_bounds = array<i64: 32, 16>}, {pipeline_mode = #tpu.pipeline_mode<synchronous>, transform_indices = @transform_5, window_bounds = array<i64: 256, 16>}, {pipeline_mode = #tpu.pipeline_mode<synchronous>, transform_indices = @transform_6, window_bounds = array<i64: 1, 1>}, {transform_indices = @transform_7, window_bounds = array<i64: 1, 256, 16>}]} {
    %c0 = arith.constant 0 : index
    %c0_0 = arith.constant 0 : index
    %c0_1 = arith.constant 0 : index
    %0 = vector.load %arg1[%c0, %c0_0, %c0_1] : memref<1x64x32xf32, #tpu.memory_space<vmem>>, vector<1x64x32xf32>
    %1 = vector.shape_cast %0 : vector<1x64x32xf32> to vector<64x32xf32>
    %c0_2 = arith.constant 0 : index
    %c0_3 = arith.constant 0 : index
    %2 = vector.load %arg2[%c0_2, %c0_3] : memref<256x64xf32, #tpu.memory_space<vmem>>, vector<256x64xf32>
    %cst = arith.constant dense<0.000000e+00> : vector<256x32xf32>
    %3 = tpu.matmul %2, %1, %cst {dimension_numbers = #tpu.dot_dimension_numbers<[1], [0], [0], [1], [0, 0, 1, 1], [], []>} : vector<256x64xf32>, vector<64x32xf32>, vector<256x32xf32> -> vector<256x32xf32>
    %cst_4 = arith.constant dense<0.000000e+00> : vector<256xf32>
    %4 = vector.multi_reduction <add>, %3, %cst_4 [1] : vector<256x32xf32> to vector<256xf32>
    %5 = vector.shape_cast %4 : vector<256xf32> to vector<256x1xf32>
    %cst_5 = arith.constant 3.200000e+01 : f32
    %6 = vector.broadcast %cst_5 : f32 to vector<256x1xf32>
    %7 = arith.divf %5, %6 : vector<256x1xf32>
    %8 = vector.broadcast %7 : vector<256x1xf32> to vector<256x32xf32>
    %9 = arith.subf %3, %8 : vector<256x32xf32>
    %10 = arith.mulf %9, %9 : vector<256x32xf32>
    %cst_6 = arith.constant dense<0.000000e+00> : vector<256xf32>
    %11 = vector.multi_reduction <add>, %10, %cst_6 [1] : vector<256x32xf32> to vector<256xf32>
    %12 = vector.shape_cast %11 : vector<256xf32> to vector<256x1xf32>
    %cst_7 = arith.constant 3.200000e+01 : f32
    %13 = vector.broadcast %cst_7 : f32 to vector<256x1xf32>
    %14 = arith.divf %12, %13 : vector<256x1xf32>
    %15 = vector.broadcast %7 : vector<256x1xf32> to vector<256x32xf32>
    %16 = arith.subf %3, %15 : vector<256x32xf32>
    %cst_8 = arith.constant 9.99999974E-6 : f32
    %17 = vector.broadcast %cst_8 : f32 to vector<256x1xf32>
    %18 = arith.addf %14, %17 : vector<256x1xf32>
    %19 = math.rsqrt %18 : vector<256x1xf32>
    %20 = vector.broadcast %19 : vector<256x1xf32> to vector<256x32xf32>
    %21 = arith.mulf %16, %20 : vector<256x32xf32>
    %c0_9 = arith.constant 0 : index
    %c0_10 = arith.constant 0 : index
    %22 = vector.load %arg3[%c0_9, %c0_10] : memref<1x32xf32, #tpu.memory_space<vmem>>, vector<1x32xf32>
    %23 = vector.broadcast %22 : vector<1x32xf32> to vector<256x32xf32>
    %24 = arith.mulf %21, %23 : vector<256x32xf32>
    %c0_11 = arith.constant 0 : index
    %c0_12 = arith.constant 0 : index
    %25 = vector.load %arg4[%c0_11, %c0_12] : memref<1x32xf32, #tpu.memory_space<vmem>>, vector<1x32xf32>
    %26 = vector.broadcast %25 : vector<1x32xf32> to vector<256x32xf32>
    %27 = arith.addf %24, %26 : vector<256x32xf32>
    %c0_13 = arith.constant 0 : index
    %c0_14 = arith.constant 0 : index
    %28 = vector.load %arg5[%c0_13, %c0_14] : memref<32x16xf32, #tpu.memory_space<vmem>>, vector<32x16xf32>
    %cst_15 = arith.constant dense<0.000000e+00> : vector<256x16xf32>
    %29 = tpu.matmul %27, %28, %cst_15 {dimension_numbers = #tpu.dot_dimension_numbers<[1], [0], [0], [1], [0, 0, 1, 1], [], []>} : vector<256x32xf32>, vector<32x16xf32>, vector<256x16xf32> -> vector<256x16xf32>
    %c0_16 = arith.constant 0 : index
    %c0_17 = arith.constant 0 : index
    %30 = vector.load %arg7[%c0_16, %c0_17] : memref<1x1xf32, #tpu.memory_space<vmem>>, vector<1x1xf32>
    %31 = vector.extract %30[0, 0] : f32 from vector<1x1xf32>
    %c0_18 = arith.constant 0 : index
    %c0_19 = arith.constant 0 : index
    %32 = vector.load %arg6[%c0_18, %c0_19] : memref<256x16xf32, #tpu.memory_space<vmem>>, vector<256x16xf32>
    %33 = vector.broadcast %31 : f32 to vector<256x16xf32>
    %34 = arith.mulf %33, %32 : vector<256x16xf32>
    %35 = arith.addf %29, %34 : vector<256x16xf32>
    %c0_20 = arith.constant 0 : index
    %c0_21 = arith.constant 0 : index
    %c0_22 = arith.constant 0 : index
    %36 = vector.load %arg8[%c0_20, %c0_21, %c0_22] : memref<1x256x16xf32, #tpu.memory_space<vmem>>, vector<1x256x16xf32>
    %37 = vector.shape_cast %36 : vector<1x256x16xf32> to vector<256x16xf32>
    %38 = vector.shape_cast %35 : vector<256x16xf32> to vector<1x256x16xf32>
    tpu.vector_store %arg8[%c0_20, %c0_21, %c0_22], %38 {strides = array<i32>} : memref<1x256x16xf32, #tpu.memory_space<vmem>>, vector<1x256x16xf32>,
    return
  }
  func.func @transform_0(%arg0: i32) -> (i32, i32, i32) {
    %c0_i32 = arith.constant 0 : i32
    %c0_i32_0 = arith.constant 0 : i32
    %c0_i32_1 = arith.constant 0 : i32
    return %arg0, %c0_i32, %c0_i32_0 : i32, i32, i32
  }
  func.func @transform_1(%arg0: i32) -> (i32, i32) {
    %c0_i32 = arith.constant 0 : i32
    %c0_i32_0 = arith.constant 0 : i32
    %c0_i32_1 = arith.constant 0 : i32
    return %c0_i32, %c0_i32_0 : i32, i32
  }
  func.func @transform_2(%arg0: i32) -> (i32, i32) {
    %c0_i32 = arith.constant 0 : i32
    %c0_i32_0 = arith.constant 0 : i32
    %c0_i32_1 = arith.constant 0 : i32
    return %c0_i32, %c0_i32_0 : i32, i32
  }
  func.func @transform_3(%arg0: i32) -> (i32, i32) {
    %c0_i32 = arith.constant 0 : i32
    %c0_i32_0 = arith.constant 0 : i32
    %c0_i32_1 = arith.constant 0 : i32
    return %c0_i32, %c0_i32_0 : i32, i32
  }
  func.func @transform_4(%arg0: i32) -> (i32, i32) {
    %c0_i32 = arith.constant 0 : i32
    %c0_i32_0 = arith.constant 0 : i32
    %c0_i32_1 = arith.constant 0 : i32
    return %c0_i32, %c0_i32_0 : i32, i32
  }
  func.func @transform_5(%arg0: i32) -> (i32, i32) {
    %c0_i32 = arith.constant 0 : i32
    %c0_i32_0 = arith.constant 0 : i32
    %c0_i32_1 = arith.constant 0 : i32
    return %c0_i32, %c0_i32_0 : i32, i32
  }
  func.func @transform_6(%arg0: i32) -> (i32, i32) {
    %c0_i32 = arith.constant 0 : i32
    %c0_i32_0 = arith.constant 0 : i32
    %c0_i32_1 = arith.constant 0 : i32
    return %c0_i32, %c0_i32_0 : i32, i32
  }
  func.func @transform_7(%arg0: i32) -> (i32, i32, i32) {
    %c0_i32 = arith.constant 0 : i32
    %c0_i32_0 = arith.constant 0 : i32
    %c0_i32_1 = arith.constant 0 : i32
    return %arg0, %c0_i32, %c0_i32_0 : i32, i32, i32
  }
}

</mosaic_0001>

<llo_original>
// kernel: bilinear_upsample.1
$region0: #{bilinear_upsample.1}
  #allocation0 [shape = 'u32[]', space=smem, size = 0x4, offset = 0x4, fixed_abs, tag = 'smem constant byte address 0x4 - core index']
  #allocation1 [shape = 'u32[144,128]{1,0:T(1,128)}', space=vmem, size = 0x12000, scoped, tag = 'internal scratch']
  #allocation2 [shape = 'f32[1,1]{1,0:T(1,128)S(1)}', space=vmem, size = 0x200, scoped, tag = 'scoped memory for bilinear_upsample.1']
  %s0 = inlined_call_operand.vmem [shape: f32[2,64,32], index: 0, kind: input, shape index: {}]
  %s1 = inlined_call_operand.vmem [shape: f32[256,64], index: 1, kind: input, shape index: {}]
  %s2 = inlined_call_operand.vmem [shape: f32[1,32], index: 2, kind: input, shape index: {}]
  %s3 = inlined_call_operand.vmem [shape: f32[1,32], index: 3, kind: input, shape index: {}]
  %s4 = inlined_call_operand.vmem [shape: f32[32,16], index: 4, kind: input, shape index: {}]
  %s5 = inlined_call_operand.vmem [shape: f32[256,16], index: 5, kind: input, shape index: {}]
  %s6 = inlined_call_operand.<no memory space> [shape: f32[1,1], index: 6, kind: input, shape index: {}]
  %s7 = inlined_call_operand.vmem [shape: f32[2,256,16], index: 7, kind: output, shape index: {}]
  %s8 = sld [smem:[#allocation0]]
  $region61: #{bilinear_upsample.1} parent=0
    _
  %s10 = ssub.s32 1, %s8
  %s11 = scalar_select 0, %s10, %s8
  %v12 = vstv %s6
  %13 = vst [vmem:[#allocation2] sm:$0x1] %v12
  loop: start=0, step=1, limit=4
  $region2: #{bilinear_upsample.1} parent=0 // loop_pre_header
    _
  $region3: #{bilinear_upsample.1} parent=0 // loop_header
    %s15 = sphi 0, %s19
    %p16 = scmp.ge.s32.totalorder %s15, 4
    %s25 = sphi 0, %s27
    %s28 = sphi 0, %s25
    %s29 = sphi 0, %s28
    %s45 = sphi 0, %s29
    %s49 = sphi 0, %s49
    %s51 = sphi 0, %s49
    %s52 = sphi 0, %s51
    %s66 = sphi 0, %s52
    %s70 = sphi 0, %s70
    %s72 = sphi 0, %s70
    %s73 = sphi 0, %s72
    %s87 = sphi 0, %s73
    %s91 = sphi 0, %s91
    %s93 = sphi 0, %s91
    %s94 = sphi 0, %s93
    %s108 = sphi 0, %s94
    %s112 = sphi 0, %s112
    %s114 = sphi 0, %s112
    %s115 = sphi 0, %s114
    %s129 = sphi 0, %s115
    %s133 = sphi 0, %s133
    %s135 = sphi 0, %s133
    %s136 = sphi 0, %s135
    %s150 = sphi 0, %s136
    %s154 = sphi 0, %s154
    %s156 = sphi 0, %s154
    %s157 = sphi 0, %s156
    %s171 = sphi 0, %s157
    %s177 = sphi 0, %s179
    %s180 = sphi 0, %s177
    %s181 = sphi 0, %s180
    %s197 = sphi 0, %s181
  $region4: #{bilinear_upsample.1} parent=0 // loop_header_branch
    %18 = sbr.rel (%p16) target = $region8
  $region5: #{bilinear_upsample.1} parent=0 // loop_body
    %s20 = ssub.s32 %s15, 1
    %s21 = ssub.s32 %s15, 2
    %s22 = sadd.s32 %s15, 1
    %s23 = ssub.s32 %s15, %s22
    %p24 = scmp.eq.s32.totalorder %s23, 0
    %s26 = sadd.s32 %s25, 1
    %s27 = scalar_select %p24, %s25, %s26
    %p30 = pneg %p24
    %p31 = scmp.eq.s32.totalorder %s15, 1
    %p32 = por %p30, %p31
    %p33 = scmp.ne.s32.totalorder %s25, %s28
    %p34 = scmp.eq.s32.totalorder %s15, 0
    %p35 = por %p33, %p34
    %p36 = scmp.ne.s32.totalorder %s25, %s28
    %p37 = scmp.eq.s32.totalorder %s20, 1
    %p38 = por %p36, %p37
    %p39 = scmp.ne.s32.totalorder %s28, %s29
    %p40 = scmp.eq.s32.totalorder %s20, 0
    %p41 = por %p39, %p40
    %p42 = scmp.ne.s32.totalorder %s28, %s29
    %p43 = scmp.eq.s32.totalorder %s21, 1
    %p44 = por %p42, %p43
    %p46 = scmp.ne.s32.totalorder %s29, %s45
    %p47 = scmp.eq.s32.totalorder %s21, 0
    %p48 = por %p46, %p47
    %s50 = sadd.s32 %s49, 1
    %p53 = scmp.eq.s32.totalorder %s15, 1
    %p54 = scmp.ne.s32.totalorder %s49, %s51
    %p55 = scmp.eq.s32.totalorder %s15, 0
    %p56 = por %p54, %p55
    %p57 = scmp.ne.s32.totalorder %s49, %s51
    %p58 = scmp.eq.s32.totalorder %s20, 1
    %p59 = por %p57, %p58
    %p60 = scmp.ne.s32.totalorder %s51, %s52
    %p61 = scmp.eq.s32.totalorder %s20, 0
    %p62 = por %p60, %p61
    %p63 = scmp.ne.s32.totalorder %s51, %s52
    %p64 = scmp.eq.s32.totalorder %s21, 1
    %p65 = por %p63, %p64
    %p67 = scmp.ne.s32.totalorder %s52, %s66
    %p68 = scmp.eq.s32.totalorder %s21, 0
    %p69 = por %p67, %p68
    %s71 = sadd.s32 %s70, 1
    %p74 = scmp.eq.s32.totalorder %s15, 1
    %p75 = scmp.ne.s32.totalorder %s70, %s72
    %p76 = scmp.eq.s32.totalorder %s15, 0
    %p77 = por %p75, %p76
    %p78 = scmp.ne.s32.totalorder %s70, %s72
    %p79 = scmp.eq.s32.totalorder %s20, 1
    %p80 = por %p78, %p79
    %p81 = scmp.ne.s32.totalorder %s72, %s73
    %p82 = scmp.eq.s32.totalorder %s20, 0
    %p83 = por %p81, %p82
    %p84 = scmp.ne.s32.totalorder %s72, %s73
    %p85 = scmp.eq.s32.totalorder %s21, 1
    %p86 = por %p84, %p85
    %p88 = scmp.ne.s32.totalorder %s73, %s87
    %p89 = scmp.eq.s32.totalorder %s21, 0
    %p90 = por %p88, %p89
    %s92 = sadd.s32 %s91, 1
    %p95 = scmp.eq.s32.totalorder %s15, 1
    %p96 = scmp.ne.s32.totalorder %s91, %s93
    %p97 = scmp.eq.s32.totalorder %s15, 0
    %p98 = por %p96, %p97
    %p99 = scmp.ne.s32.totalorder %s91, %s93
    %p100 = scmp.eq.s32.totalorder %s20, 1
    %p101 = por %p99, %p100
    %p102 = scmp.ne.s32.totalorder %s93, %s94
    %p103 = scmp.eq.s32.totalorder %s20, 0
    %p104 = por %p102, %p103
    %p105 = scmp.ne.s32.totalorder %s93, %s94
    %p106 = scmp.eq.s32.totalorder %s21, 1
    %p107 = por %p105, %p106
    %p109 = scmp.ne.s32.totalorder %s94, %s108
    %p110 = scmp.eq.s32.totalorder %s21, 0
    %p111 = por %p109, %p110
    %s113 = sadd.s32 %s112, 1
    %p116 = scmp.eq.s32.totalorder %s15, 1
    %p117 = scmp.ne.s32.totalorder %s112, %s114
    %p118 = scmp.eq.s32.totalorder %s15, 0
    %p119 = por %p117, %p118
    %p120 = scmp.ne.s32.totalorder %s112, %s114
    %p121 = scmp.eq.s32.totalorder %s20, 1
    %p122 = por %p120, %p121
    %p123 = scmp.ne.s32.totalorder %s114, %s115
    %p124 = scmp.eq.s32.totalorder %s20, 0
    %p125 = por %p123, %p124
    %p126 = scmp.ne.s32.totalorder %s114, %s115
    %p127 = scmp.eq.s32.totalorder %s21, 1
    %p128 = por %p126, %p127
    %p130 = scmp.ne.s32.totalorder %s115, %s129
    %p131 = scmp.eq.s32.totalorder %s21, 0
    %p132 = por %p130, %p131
    %s134 = sadd.s32 %s133, 1
    %p137 = scmp.eq.s32.totalorder %s15, 1
    %p138 = scmp.ne.s32.totalorder %s133, %s135
    %p139 = scmp.eq.s32.totalorder %s15, 0
    %p140 = por %p138, %p139
    %p141 = scmp.ne.s32.totalorder %s133, %s135
    %p142 = scmp.eq.s32.totalorder %s20, 1
    %p143 = por %p141, %p142
    %p144 = scmp.ne.s32.totalorder %s135, %s136
    %p145 = scmp.eq.s32.totalorder %s20, 0
    %p146 = por %p144, %p145
    %p147 = scmp.ne.s32.totalorder %s135, %s136
    %p148 = scmp.eq.s32.totalorder %s21, 1
    %p149 = por %p147, %p148
    %p151 = scmp.ne.s32.totalorder %s136, %s150
    %p152 = scmp.eq.s32.totalorder %s21, 0
    %p153 = por %p151, %p152
    %s155 = sadd.s32 %s154, 1
    %p158 = scmp.eq.s32.totalorder %s15, 1
    %p159 = scmp.ne.s32.totalorder %s154, %s156
    %p160 = scmp.eq.s32.totalorder %s15, 0
    %p161 = por %p159, %p160
    %p162 = scmp.ne.s32.totalorder %s154, %s156
    %p163 = scmp.eq.s32.totalorder %s20, 1
    %p164 = por %p162, %p163
    %p165 = scmp.ne.s32.totalorder %s156, %s157
    %p166 = scmp.eq.s32.totalorder %s20, 0
    %p167 = por %p165, %p166
    %p168 = scmp.ne.s32.totalorder %s156, %s157
    %p169 = scmp.eq.s32.totalorder %s21, 1
    %p170 = por %p168, %p169
    %p172 = scmp.ne.s32.totalorder %s157, %s171
    %p173 = scmp.eq.s32.totalorder %s21, 0
    %p174 = por %p172, %p173
    %s175 = ssub.s32 %s15, %s22
    %p176 = scmp.eq.s32.totalorder %s175, 0
    %s178 = sadd.s32 %s177, 1
    %s179 = scalar_select %p176, %s177, %s178
    %p182 = pneg %p176
    %p183 = scmp.eq.s32.totalorder %s15, 1
    %p184 = por %p182, %p183
    %p185 = scmp.ne.s32.totalorder %s177, %s180
    %p186 = scmp.eq.s32.totalorder %s15, 0
    %p187 = por %p185, %p186
    %p188 = scmp.ne.s32.totalorder %s177, %s180
    %p189 = scmp.eq.s32.totalorder %s20, 1
    %p190 = por %p188, %p189
    %p191 = scmp.ne.s32.totalorder %s180, %s181
    %p192 = scmp.eq.s32.totalorder %s20, 0
    %p193 = por %p191, %p192
    %p194 = scmp.ne.s32.totalorder %s180, %s181
    %p195 = scmp.eq.s32.totalorder %s21, 1
    %p196 = por %p194, %p195
    %p198 = scmp.ne.s32.totalorder %s181, %s197
    %p199 = scmp.eq.s32.totalorder %s21, 0
    %p200 = por %p198, %p199
    %p201 = scmp.le.s32.totalorder 1, %s15
    %p202 = scmp.lt.s32.totalorder %s15, 3
    %p203 = pnand %p201, %p202
    %p204 = pneg %p203
    // Predicated region
    $region9: #{bilinear_upsample.1} parent=5 // pred_check
      _
    $region10: #{bilinear_upsample.1} parent=5 // pred_check_branch
      %206 = sbr.rel (%p203) target = $region12
    $region11: #{bilinear_upsample.1} parent=5 // pred_region
      %s207 = ssub.s32 %s15, 1
      // Predicated region
      $region13: #{bilinear_upsample.1} parent=11 // pred_check
        %p208 = pneg %p62
      $region14: #{bilinear_upsample.1} parent=11 // pred_check_branch
        %210 = sbr.rel (%p208) target = $region16
      $region15: #{bilinear_upsample.1} parent=11 // pred_region
        _
      $region16: #{bilinear_upsample.1} parent=11 // pred_fallthru
        _
      // Predicated region
      $region17: #{bilinear_upsample.1} parent=11 // pred_check
        %p211 = pneg %p83
      $region18: #{bilinear_upsample.1} parent=11 // pred_check_branch
        %213 = sbr.rel (%p211) target = $region20
      $region19: #{bilinear_upsample.1} parent=11 // pred_region
        _
      $region20: #{bilinear_upsample.1} parent=11 // pred_fallthru
        _
      // Predicated region
      $region21: #{bilinear_upsample.1} parent=11 // pred_check
        %p214 = pneg %p104
      $region22: #{bilinear_upsample.1} parent=11 // pred_check_branch
        %216 = sbr.rel (%p214) target = $region24
      $region23: #{bilinear_upsample.1} parent=11 // pred_region
        _
      $region24: #{bilinear_upsample.1} parent=11 // pred_fallthru
        _
      // Predicated region
      $region25: #{bilinear_upsample.1} parent=11 // pred_check
        %p217 = pneg %p125
      $region26: #{bilinear_upsample.1} parent=11 // pred_check_branch
        %219 = sbr.rel (%p217) target = $region28
      $region27: #{bilinear_upsample.1} parent=11 // pred_region
        _
      $region28: #{bilinear_upsample.1} parent=11 // pred_fallthru
        _
      // Predicated region
      $region29: #{bilinear_upsample.1} parent=11 // pred_check
        %p220 = pneg %p146
      $region30: #{bilinear_upsample.1} parent=11 // pred_check_branch
        %222 = sbr.rel (%p220) target = $region32
      $region31: #{bilinear_upsample.1} parent=11 // pred_region
        _
      $region32: #{bilinear_upsample.1} parent=11 // pred_fallthru
        _
      // Predicated region
      $region33: #{bilinear_upsample.1} parent=11 // pred_check
        %p223 = pneg %p167
      $region34: #{bilinear_upsample.1} parent=11 // pred_check_branch
        %225 = sbr.rel (%p223) target = $region36
      $region35: #{bilinear_upsample.1} parent=11 // pred_region
        _
      $region36: #{bilinear_upsample.1} parent=11 // pred_fallthru
        _
    $region12: #{bilinear_upsample.1} parent=5 // pred_fallthru
      _
    %p226 = scmp.lt.s32.totalorder %s15, 2
    // Predicated region
    $region37: #{bilinear_upsample.1} parent=5 // pred_check
      %p227 = pneg %p226
    $region38: #{bilinear_upsample.1} parent=5 // pred_check_branch
      %229 = sbr.rel (%p227) target = $region40
    $region39: #{bilinear_upsample.1} parent=5 // pred_region
      // Predicated region
      $region41: #{bilinear_upsample.1} parent=39 // pred_check
        %p230 = pneg %p35
      $region42: #{bilinear_upsample.1} parent=39 // pred_check_branch
        %232 = sbr.rel (%p230) target = $region44
      $region43: #{bilinear_upsample.1} parent=39 // pred_region
        %p233 = scmp.lt.s32.totalorder %s15, 1
        %s234 = scalar_select %p233, %s15, 1
        %s235 = smul.addr %s234, 8
        %s236 = smul.addr %s235, 8
        %s237 = scalar_lea.vmem %s0, %s236
      $region44: #{bilinear_upsample.1} parent=39 // pred_fallthru
        _
    $region40: #{bilinear_upsample.1} parent=5 // pred_fallthru
      _
    %p238 = scmp.le.s32.totalorder 1, %s15
    %p239 = scmp.lt.s32.totalorder %s15, 3
    %p240 = pnand %p238, %p239
    %p241 = pneg %p240
    // Predicated region
    $region45: #{bilinear_upsample.1} parent=5 // pred_check
      _
    $region46: #{bilinear_upsample.1} parent=5 // pred_check_branch
      %243 = sbr.rel (%p240) target = $region48
    $region47: #{bilinear_upsample.1} parent=5 // pred_region
      %s244 = ssub.s32 %s15, 1
      %p245 = scmp.lt.s32.totalorder %s20, 1
      %s246 = scalar_select %p245, %s20, 1
      %s247 = smul.addr %s246, 8
      %s248 = smul.addr %s247, 8
      %s249 = scalar_lea.vmem %s0, %s248
      %p250 = pneg %p41
      %p251 = pneg %p38
      %p252 = pneg %p62
      %p253 = pneg %p59
      %p254 = pneg %p83
      %p255 = pneg %p80
      %p256 = pneg %p104
      %p257 = pneg %p101
      %p258 = pneg %p125
      %p259 = pneg %p122
      %p260 = pneg %p146
      %p261 = pneg %p143
      %p262 = pneg %p167
      %p263 = pneg %p164
      %p264 = pneg %p193
      %p265 = pneg %p190
      %p266 = scmp.lt.s32.totalorder %s20, 1
      %s267 = scalar_select %p266, %s20, 1
      %s268 = smul.addr %s267, 32
      %s269 = smul.addr %s268, 8
      %s270 = scalar_lea.vmem %s7, %s269
      %p271 = scmp.lt.s32.totalorder %s20, 1
      %s272 = scalar_select %p271, %s20, 1
      %s273 = smul.addr %s272, 8
      %s274 = smul.addr %s273, 8
      %s275 = scalar_lea.vmem %s0, %s274
      %p276 = scmp.lt.s32.totalorder %s20, 1
      %s277 = scalar_select %p276, %s20, 1
      %s278 = smul.addr %s277, 32
      %s279 = smul.addr %s278, 8
      %s280 = scalar_lea.vmem %s7, %s279
      %v281 = vld [vmem:[%s275] sm:$0xff]
      %v282 = vld [vmem:[%s275 + $0x8] sm:$0xff]
      %v283 = vld [vmem:[%s275 + $0x10] sm:$0xff]
      %v284 = vld [vmem:[%s275 + $0x18] sm:$0xff]
      %v285 = vld [vmem:[%s275 + $0x20] sm:$0xff]
      %v286 = vld [vmem:[%s275 + $0x28] sm:$0xff]
      %v287 = vld [vmem:[%s275 + $0x30] sm:$0xff]
      %v288 = vld [vmem:[%s275 + $0x38] sm:$0xff]
      %v289 = vld [vmem:[%s1] sm:$0xff]
      %v290 = vld [vmem:[%s1 + $0x8] sm:$0xff]
      %v291 = vld [vmem:[%s1 + $0x10] sm:$0xff]
      %v292 = vld [vmem:[%s1 + $0x18] sm:$0xff]
      %v293 = vld [vmem:[%s1 + $0x20] sm:$0xff]
      %v294 = vld [vmem:[%s1 + $0x28] sm:$0xff]
      %v295 = vld [vmem:[%s1 + $0x30] sm:$0xff]
      %v296 = vld [vmem:[%s1 + $0x38] sm:$0xff]
      %v297 = vld [vmem:[%s1 + $0x40] sm:$0xff]
      %v298 = vld [vmem:[%s1 + $0x48] sm:$0xff]
      %v299 = vld [vmem:[%s1 + $0x50] sm:$0xff]
      %v300 = vld [vmem:[%s1 + $0x58] sm:$0xff]
      %v301 = vld [vmem:[%s1 + $0x60] sm:$0xff]
      %v302 = vld [vmem:[%s1 + $0x68] sm:$0xff]
      %v303 = vld [vmem:[%s1 + $0x70] sm:$0xff]
      %v304 = vld [vmem:[%s1 + $0x78] sm:$0xff]
      %v305 = vld [vmem:[%s1 + $0x80] sm:$0xff]
      %v306 = vld [vmem:[%s1 + $0x88] sm:$0xff]
      %v307 = vld [vmem:[%s1 + $0x90] sm:$0xff]
      %v308 = vld [vmem:[%s1 + $0x98] sm:$0xff]
      %v309 = vld [vmem:[%s1 + $0xa0] sm:$0xff]
      %v310 = vld [vmem:[%s1 + $0xa8] sm:$0xff]
      %v311 = vld [vmem:[%s1 + $0xb0] sm:$0xff]
      %v312 = vld [vmem:[%s1 + $0xb8] sm:$0xff]
      %v313 = vld [vmem:[%s1 + $0xc0] sm:$0xff]
      %v314 = vld [vmem:[%s1 + $0xc8] sm:$0xff]
      %v315 = vld [vmem:[%s1 + $0xd0] sm:$0xff]
      %v316 = vld [vmem:[%s1 + $0xd8] sm:$0xff]
      %v317 = vld [vmem:[%s1 + $0xe0] sm:$0xff]
      %v318 = vld [vmem:[%s1 + $0xe8] sm:$0xff]
      %v319 = vld [vmem:[%s1 + $0xf0] sm:$0xff]
      %v320 = vld [vmem:[%s1 + $0xf8] sm:$0xff]
      %vm321 = vcmask 523264
      %v323 = vsel %vm321, %v289, 0
      %v326 = vsel %vm321, %v290, 0
      %v329 = vsel %vm321, %v291, 0
      %v332 = vsel %vm321, %v292, 0
      %v335 = vsel %vm321, %v293, 0
      %v338 = vsel %vm321, %v294, 0
      %v341 = vsel %vm321, %v295, 0
      %v344 = vsel %vm321, %v296, 0
      %v347 = vsel %vm321, %v297, 0
      %v350 = vsel %vm321, %v298, 0
      %v353 = vsel %vm321, %v299, 0
      %v356 = vsel %vm321, %v300, 0
      %v359 = vsel %vm321, %v301, 0
      %v362 = vsel %vm321, %v302, 0
      %v365 = vsel %vm321, %v303, 0
      %v368 = vsel %vm321, %v304, 0
      %v371 = vsel %vm321, %v305, 0
      %v374 = vsel %vm321, %v306, 0
      %v377 = vsel %vm321, %v307, 0
      %v380 = vsel %vm321, %v308, 0
      %v383 = vsel %vm321, %v309, 0
      %v386 = vsel %vm321, %v310, 0
      %v389 = vsel %vm321, %v311, 0
      %v392 = vsel %vm321, %v312, 0
      %v395 = vsel %vm321, %v313, 0
      %v398 = vsel %vm321, %v314, 0
      %v401 = vsel %vm321, %v315, 0
      %v404 = vsel %vm321, %v316, 0
      %v407 = vsel %vm321, %v317, 0
      %v410 = vsel %vm321, %v318, 0
      %v413 = vsel %vm321, %v319, 0
      %v416 = vsel %vm321, %v320, 0
      %418 = vmatprep.subr.mxu0 0.0
      %419 = vmatpush1.msra.mxu0 0.0
      %420 = vmatprep.subr.mxu0 0.0
      %421 = vmatpush1.msra.mxu0 0.0
      %422 = vmatprep.subr.mxu0 0.0
      %423 = vmatpush1.msra.mxu0 0.0
      %424 = vmatprep.subr.mxu0 0.0
      %425 = vmatpush1.msra.mxu0 0.0
      %426 = vmatprep.subr.mxu0 0.0
      %427 = vmatpush1.msra.mxu0 0.0
      %428 = vmatprep.subr.mxu0 0.0
      %429 = vmatpush1.msra.mxu0 0.0
      %430 = vmatprep.subr.mxu0 0.0
      %431 = vmatpush1.msra.mxu0 0.0
      %432 = vmatprep.subr.mxu0 0.0
      %433 = vmatpush1.msra.mxu0 0.0
      %434 = vmatprep.subr.mxu0 0.0
      %435 = vmatpush1.msra.mxu0 %v288
      %436 = vmatprep.subr.mxu0 0.0
      %437 = vmatpush1.msra.mxu0 %v287
      %438 = vmatprep.subr.mxu0 0.0
      %439 = vmatpush1.msra.mxu0 %v286
      %440 = vmatprep.subr.mxu0 0.0
      %441 = vmatpush1.msra.mxu0 %v285
      %442 = vmatprep.subr.mxu0 0.0
      %443 = vmatpush1.msra.mxu0 %v284
      %444 = vmatprep.subr.mxu0 0.0
      %445 = vmatpush1.msra.mxu0 %v283
      %446 = vmatprep.subr.mxu0 0.0
      %447 = vmatpush1.msra.mxu0 %v282
      %448 = vmatprep.subr.mxu0 0.0
      %449 = vmatpush1.msra.mxu0 %v281
      %450 = vmatprep.subr.mxu0 0.0
      %451 = vmatpush2.msra.mxu0 0.0
      %452 = vmatprep.subr.mxu0 0.0
      %453 = vmatpush2.msra.mxu0 0.0
      %454 = vmatprep.subr.mxu0 0.0
      %455 = vmatpush2.msra.mxu0 0.0
      %456 = vmatprep.subr.mxu0 0.0
      %457 = vmatpush2.msra.mxu0 0.0
      %458 = vmatprep.subr.mxu0 0.0
      %459 = vmatpush2.msra.mxu0 0.0
      %460 = vmatprep.subr.mxu0 0.0
      %461 = vmatpush2.msra.mxu0 0.0
      %462 = vmatprep.subr.mxu0 0.0
      %463 = vmatpush2.msra.mxu0 0.0
      %464 = vmatprep.subr.mxu0 0.0
      %465 = vmatpush2.msra.mxu0 0.0
      %466 = vmatprep.subr.mxu0 0.0
      %467 = vmatpush2.msra.mxu0 0.0
      %468 = vmatprep.subr.mxu0 0.0
      %469 = vmatpush2.msra.mxu0 0.0
      %470 = vmatprep.subr.mxu0 0.0
      %471 = vmatpush2.msra.mxu0 0.0
      %472 = vmatprep.subr.mxu0 0.0
      %473 = vmatpush2.msra.mxu0 0.0
      %474 = vmatprep.subr.mxu0 0.0
      %475 = vmatpush2.msra.mxu0 0.0
      %476 = vmatprep.subr.mxu0 0.0
      %477 = vmatpush2.msra.mxu0 0.0
      %478 = vmatprep.subr.mxu0 0.0
      %479 = vmatpush2.msra.mxu0 0.0
      %480 = vmatprep.subr.mxu0 0.0
      %481 = vmatpush2.msra.mxu0 0.0
      %482 = vmatprep.mubr.f32.mxu0 0.0
      %483 = vmatmul.mubr.f32.gmra.mxu0 %v323
      %v484 = vpop.f32.mrf.mxu0
      %v485 = vadd.f32 0.0, %v484
      %v486 = vpop.f32.mrf.mxu0
      %487 = vmatprep.mubr.f32.mxu0 0.0
      %488 = vmatmul.mubr.f32.gmra.mxu0 %v326
      %v489 = vpop.f32.mrf.mxu0
      %v490 = vadd.f32 0.0, %v489
      %v491 = vpop.f32.mrf.mxu0
      %492 = vmatprep.mubr.f32.mxu0 0.0
      %493 = vmatmul.mubr.f32.gmra.mxu0 %v329
      %v494 = vpop.f32.mrf.mxu0
      %v495 = vadd.f32 0.0, %v494
      %v496 = vpop.f32.mrf.mxu0
      %497 = vmatprep.mubr.f32.mxu0 0.0
      %498 = vmatmul.mubr.f32.gmra.mxu0 %v332
      %v499 = vpop.f32.mrf.mxu0
      %v500 = vadd.f32 0.0, %v499
      %v501 = vpop.f32.mrf.mxu0
      %502 = vmatprep.mubr.f32.mxu0 0.0
      %503 = vmatmul.mubr.f32.gmra.mxu0 %v335
      %v504 = vpop.f32.mrf.mxu0
      %v505 = vadd.f32 0.0, %v504
      %v506 = vpop.f32.mrf.mxu0
      %507 = vmatprep.mubr.f32.mxu0 0.0
      %508 = vmatmul.mubr.f32.gmra.mxu0 %v338
      %v509 = vpop.f32.mrf.mxu0
      %v510 = vadd.f32 0.0, %v509
      %v511 = vpop.f32.mrf.mxu0
      %512 = vmatprep.mubr.f32.mxu0 0.0
      %513 = vmatmul.mubr.f32.gmra.mxu0 %v341
      %v514 = vpop.f32.mrf.mxu0
      %v515 = vadd.f32 0.0, %v514
      %v516 = vpop.f32.mrf.mxu0
      %517 = vmatprep.mubr.f32.mxu0 0.0
      %518 = vmatmul.mubr.f32.gmra.mxu0 %v344
      %v519 = vpop.f32.mrf.mxu0
      %v520 = vadd.f32 0.0, %v519
      %v521 = vpop.f32.mrf.mxu0
      %522 = vmatprep.mubr.f32.mxu0 0.0
      %523 = vmatmul.mubr.f32.gmra.mxu0 %v347
      %v524 = vpop.f32.mrf.mxu0
      %v525 = vadd.f32 0.0, %v524
      %v526 = vpop.f32.mrf.mxu0
      %527 = vmatprep.mubr.f32.mxu0 0.0
      %528 = vmatmul.mubr.f32.gmra.mxu0 %v350
      %v529 = vpop.f32.mrf.mxu0
      %v530 = vadd.f32 0.0, %v529
      %v531 = vpop.f32.mrf.mxu0
      %532 = vmatprep.mubr.f32.mxu0 0.0
      %533 = vmatmul.mubr.f32.gmra.mxu0 %v353
      %v534 = vpop.f32.mrf.mxu0
      %v535 = vadd.f32 0.0, %v534
      %v536 = vpop.f32.mrf.mxu0
      %537 = vmatprep.mubr.f32.mxu0 0.0
      %538 = vmatmul.mubr.f32.gmra.mxu0 %v356
      %v539 = vpop.f32.mrf.mxu0
      %v540 = vadd.f32 0.0, %v539
      %v541 = vpop.f32.mrf.mxu0
      %542 = vmatprep.mubr.f32.mxu0 0.0
      %543 = vmatmul.mubr.f32.gmra.mxu0 %v359
      %v544 = vpop.f32.mrf.mxu0
      %v545 = vadd.f32 0.0, %v544
      %v546 = vpop.f32.mrf.mxu0
      %547 = vmatprep.mubr.f32.mxu0 0.0
      %548 = vmatmul.mubr.f32.gmra.mxu0 %v362
      %v549 = vpop.f32.mrf.mxu0
      %v550 = vadd.f32 0.0, %v549
      %v551 = vpop.f32.mrf.mxu0
      %552 = vmatprep.mubr.f32.mxu0 0.0
      %553 = vmatmul.mubr.f32.gmra.mxu0 %v365
      %v554 = vpop.f32.mrf.mxu0
      %v555 = vadd.f32 0.0, %v554
      %v556 = vpop.f32.mrf.mxu0
      %557 = vmatprep.mubr.f32.mxu0 0.0
      %558 = vmatmul.mubr.f32.gmra.mxu0 %v368
      %v559 = vpop.f32.mrf.mxu0
      %v560 = vadd.f32 0.0, %v559
      %v561 = vpop.f32.mrf.mxu0
      %562 = vmatprep.mubr.f32.mxu0 0.0
      %563 = vmatmul.mubr.f32.gmra.mxu0 %v371
      %v564 = vpop.f32.mrf.mxu0
      %v565 = vadd.f32 0.0, %v564
      %v566 = vpop.f32.mrf.mxu0
      %567 = vmatprep.mubr.f32.mxu0 0.0
      %568 = vmatmul.mubr.f32.gmra.mxu0 %v374
      %v569 = vpop.f32.mrf.mxu0
      %v570 = vadd.f32 0.0, %v569
      %v571 = vpop.f32.mrf.mxu0
      %572 = vmatprep.mubr.f32.mxu0 0.0
      %573 = vmatmul.mubr.f32.gmra.mxu0 %v377
      %v574 = vpop.f32.mrf.mxu0
      %v575 = vadd.f32 0.0, %v574
      %v576 = vpop.f32.mrf.mxu0
      %577 = vmatprep.mubr.f32.mxu0 0.0
      %578 = vmatmul.mubr.f32.gmra.mxu0 %v380
      %v579 = vpop.f32.mrf.mxu0
      %v580 = vadd.f32 0.0, %v579
      %v581 = vpop.f32.mrf.mxu0
      %582 = vmatprep.mubr.f32.mxu0 0.0
      %583 = vmatmul.mubr.f32.gmra.mxu0 %v383
      %v584 = vpop.f32.mrf.mxu0
      %v585 = vadd.f32 0.0, %v584
      %v586 = vpop.f32.mrf.mxu0
      %587 = vmatprep.mubr.f32.mxu0 0.0
      %588 = vmatmul.mubr.f32.gmra.mxu0 %v386
      %v589 = vpop.f32.mrf.mxu0
      %v590 = vadd.f32 0.0, %v589
      %v591 = vpop.f32.mrf.mxu0
      %592 = vmatprep.mubr.f32.mxu0 0.0
      %593 = vmatmul.mubr.f32.gmra.mxu0 %v389
      %v594 = vpop.f32.mrf.mxu0
      %v595 = vadd.f32 0.0, %v594
      %v596 = vpop.f32.mrf.mxu0
      %597 = vmatprep.mubr.f32.mxu0 0.0
      %598 = vmatmul.mubr.f32.gmra.mxu0 %v392
      %v599 = vpop.f32.mrf.mxu0
      %v600 = vadd.f32 0.0, %v599
      %v601 = vpop.f32.mrf.mxu0
      %602 = vmatprep.mubr.f32.mxu0 0.0
      %603 = vmatmul.mubr.f32.gmra.mxu0 %v395
      %v604 = vpop.f32.mrf.mxu0
      %v605 = vadd.f32 0.0, %v604
      %v606 = vpop.f32.mrf.mxu0
      %607 = vmatprep.mubr.f32.mxu0 0.0
      %608 = vmatmul.mubr.f32.gmra.mxu0 %v398
      %v609 = vpop.f32.mrf.mxu0
      %v610 = vadd.f32 0.0, %v609
      %v611 = vpop.f32.mrf.mxu0
      %612 = vmatprep.mubr.f32.mxu0 0.0
      %613 = vmatmul.mubr.f32.gmra.mxu0 %v401
      %v614 = vpop.f32.mrf.mxu0
      %v615 = vadd.f32 0.0, %v614
      %v616 = vpop.f32.mrf.mxu0
      %617 = vmatprep.mubr.f32.mxu0 0.0
      %618 = vmatmul.mubr.f32.gmra.mxu0 %v404
      %v619 = vpop.f32.mrf.mxu0
      %v620 = vadd.f32 0.0, %v619
      %v621 = vpop.f32.mrf.mxu0
      %622 = vmatprep.mubr.f32.mxu0 0.0
      %623 = vmatmul.mubr.f32.gmra.mxu0 %v407
      %v624 = vpop.f32.mrf.mxu0
      %v625 = vadd.f32 0.0, %v624
      %v626 = vpop.f32.mrf.mxu0
      %627 = vmatprep.mubr.f32.mxu0 0.0
      %628 = vmatmul.mubr.f32.gmra.mxu0 %v410
      %v629 = vpop.f32.mrf.mxu0
      %v630 = vadd.f32 0.0, %v629
      %v631 = vpop.f32.mrf.mxu0
      %632 = vmatprep.mubr.f32.mxu0 0.0
      %633 = vmatmul.mubr.f32.gmra.mxu0 %v413
      %v634 = vpop.f32.mrf.mxu0
      %v635 = vadd.f32 0.0, %v634
      %v636 = vpop.f32.mrf.mxu0
      %637 = vmatprep.mubr.f32.mxu0 0.0
      %638 = vmatmul.mubr.f32.gmra.mxu0 %v416
      %v639 = vpop.f32.mrf.mxu0
      %v640 = vadd.f32 0.0, %v639
      %v641 = vpop.f32.mrf.mxu0
      %642 = vdwg.mxu0
      %vm643 = vcmask 261120
      %v644 = vsel %vm643, %v485, 0.0
      %645 = vadd.xlane.f32.xlu0 %v644
      %v646 = vpop.xlane.xlu0 %645
      %v647 = vsel %vm643, %v490, 0.0
      %648 = vadd.xlane.f32.xlu0 %v647
      %v649 = vpop.xlane.xlu0 %648
      %v650 = vsel %vm643, %v495, 0.0
      %651 = vadd.xlane.f32.xlu0 %v650
      %v652 = vpop.xlane.xlu0 %651
      %v653 = vsel %vm643, %v500, 0.0
      %654 = vadd.xlane.f32.xlu0 %v653
      %v655 = vpop.xlane.xlu0 %654
      %v656 = vsel %vm643, %v505, 0.0
      %657 = vadd.xlane.f32.xlu0 %v656
      %v658 = vpop.xlane.xlu0 %657
      %v659 = vsel %vm643, %v510, 0.0
      %660 = vadd.xlane.f32.xlu0 %v659
      %v661 = vpop.xlane.xlu0 %660
      %v662 = vsel %vm643, %v515, 0.0
      %663 = vadd.xlane.f32.xlu0 %v662
      %v664 = vpop.xlane.xlu0 %663
      %v665 = vsel %vm643, %v520, 0.0
      %666 = vadd.xlane.f32.xlu0 %v665
      %v667 = vpop.xlane.xlu0 %666
      %v668 = vsel %vm643, %v525, 0.0
      %669 = vadd.xlane.f32.xlu0 %v668
      %v670 = vpop.xlane.xlu0 %669
      %v671 = vsel %vm643, %v530, 0.0
      %672 = vadd.xlane.f32.xlu0 %v671
      %v673 = vpop.xlane.xlu0 %672
      %v674 = vsel %vm643, %v535, 0.0
      %675 = vadd.xlane.f32.xlu0 %v674
      %v676 = vpop.xlane.xlu0 %675
      %v677 = vsel %vm643, %v540, 0.0
      %678 = vadd.xlane.f32.xlu0 %v677
      %v679 = vpop.xlane.xlu0 %678
      %v680 = vsel %vm643, %v545, 0.0
      %681 = vadd.xlane.f32.xlu0 %v680
      %v682 = vpop.xlane.xlu0 %681
      %v683 = vsel %vm643, %v550, 0.0
      %684 = vadd.xlane.f32.xlu0 %v683
      %v685 = vpop.xlane.xlu0 %684
      %v686 = vsel %vm643, %v555, 0.0
      %687 = vadd.xlane.f32.xlu0 %v686
      %v688 = vpop.xlane.xlu0 %687
      %v689 = vsel %vm643, %v560, 0.0
      %690 = vadd.xlane.f32.xlu0 %v689
      %v691 = vpop.xlane.xlu0 %690
      %v692 = vsel %vm643, %v565, 0.0
      %693 = vadd.xlane.f32.xlu0 %v692
      %v694 = vpop.xlane.xlu0 %693
      %v695 = vsel %vm643, %v570, 0.0
      %696 = vadd.xlane.f32.xlu0 %v695
      %v697 = vpop.xlane.xlu0 %696
      %v698 = vsel %vm643, %v575, 0.0
      %699 = vadd.xlane.f32.xlu0 %v698
      %v700 = vpop.xlane.xlu0 %699
      %v701 = vsel %vm643, %v580, 0.0
      %702 = vadd.xlane.f32.xlu0 %v701
      %v703 = vpop.xlane.xlu0 %702
      %v704 = vsel %vm643, %v585, 0.0
      %705 = vadd.xlane.f32.xlu0 %v704
      %v706 = vpop.xlane.xlu0 %705
      %v707 = vsel %vm643, %v590, 0.0
      %708 = vadd.xlane.f32.xlu0 %v707
      %v709 = vpop.xlane.xlu0 %708
      %v710 = vsel %vm643, %v595, 0.0
      %711 = vadd.xlane.f32.xlu0 %v710
      %v712 = vpop.xlane.xlu0 %711
      %v713 = vsel %vm643, %v600, 0.0
      %714 = vadd.xlane.f32.xlu0 %v713
      %v715 = vpop.xlane.xlu0 %714
      %v716 = vsel %vm643, %v605, 0.0
      %717 = vadd.xlane.f32.xlu0 %v716
      %v718 = vpop.xlane.xlu0 %717
      %v719 = vsel %vm643, %v610, 0.0
      %720 = vadd.xlane.f32.xlu0 %v719
      %v721 = vpop.xlane.xlu0 %720
      %v722 = vsel %vm643, %v615, 0.0
      %723 = vadd.xlane.f32.xlu0 %v722
      %v724 = vpop.xlane.xlu0 %723
      %v725 = vsel %vm643, %v620, 0.0
      %726 = vadd.xlane.f32.xlu0 %v725
      %v727 = vpop.xlane.xlu0 %726
      %v728 = vsel %vm643, %v625, 0.0
      %729 = vadd.xlane.f32.xlu0 %v728
      %v730 = vpop.xlane.xlu0 %729
      %v731 = vsel %vm643, %v630, 0.0
      %732 = vadd.xlane.f32.xlu0 %v731
      %v733 = vpop.xlane.xlu0 %732
      %v734 = vsel %vm643, %v635, 0.0
      %735 = vadd.xlane.f32.xlu0 %v734
      %v736 = vpop.xlane.xlu0 %735
      %v737 = vsel %vm643, %v640, 0.0
      %738 = vadd.xlane.f32.xlu0 %v737
      %v739 = vpop.xlane.xlu0 %738
      %v740 = vrcp.pop 32.0
      %v741 = vmul.f32 %v646, %v740
      %v742 = vmul.f32 %v649, %v740
      %v743 = vmul.f32 %v652, %v740
      %v744 = vmul.f32 %v655, %v740
      %v745 = vmul.f32 %v658, %v740
      %v746 = vmul.f32 %v661, %v740
      %v747 = vmul.f32 %v664, %v740
      %v748 = vmul.f32 %v667, %v740
      %v749 = vmul.f32 %v670, %v740
      %v750 = vmul.f32 %v673, %v740
      %v751 = vmul.f32 %v676, %v740
      %v752 = vmul.f32 %v679, %v740
      %v753 = vmul.f32 %v682, %v740
      %v754 = vmul.f32 %v685, %v740
      %v755 = vmul.f32 %v688, %v740
      %v756 = vmul.f32 %v691, %v740
      %v757 = vmul.f32 %v694, %v740
      %v758 = vmul.f32 %v697, %v740
      %v759 = vmul.f32 %v700, %v740
      %v760 = vmul.f32 %v703, %v740
      %v761 = vmul.f32 %v706, %v740
      %v762 = vmul.f32 %v709, %v740
      %v763 = vmul.f32 %v712, %v740
      %v764 = vmul.f32 %v715, %v740
      %v765 = vmul.f32 %v718, %v740
      %v766 = vmul.f32 %v721, %v740
      %v767 = vmul.f32 %v724, %v740
      %v768 = vmul.f32 %v727, %v740
      %v769 = vmul.f32 %v730, %v740
      %v770 = vmul.f32 %v733, %v740
      %v771 = vmul.f32 %v736, %v740
      %v772 = vmul.f32 %v739, %v740
      %v773 = vsub.f32 %v485, %v741
      %v774 = vsub.f32 %v490, %v742
      %v775 = vsub.f32 %v495, %v743
      %v776 = vsub.f32 %v500, %v744
      %v777 = vsub.f32 %v505, %v745
      %v778 = vsub.f32 %v510, %v746
      %v779 = vsub.f32 %v515, %v747
      %v780 = vsub.f32 %v520, %v748
      %v781 = vsub.f32 %v525, %v749
      %v782 = vsub.f32 %v530, %v750
      %v783 = vsub.f32 %v535, %v751
      %v784 = vsub.f32 %v540, %v752
      %v785 = vsub.f32 %v545, %v753
      %v786 = vsub.f32 %v550, %v754
      %v787 = vsub.f32 %v555, %v755
      %v788 = vsub.f32 %v560, %v756
      %v789 = vsub.f32 %v565, %v757
      %v790 = vsub.f32 %v570, %v758
      %v791 = vsub.f32 %v575, %v759
      %v792 = vsub.f32 %v580, %v760
      %v793 = vsub.f32 %v585, %v761
      %v794 = vsub.f32 %v590, %v762
      %v795 = vsub.f32 %v595, %v763
      %v796 = vsub.f32 %v600, %v764
      %v797 = vsub.f32 %v605, %v765
      %v798 = vsub.f32 %v610, %v766
      %v799 = vsub.f32 %v615, %v767
      %v800 = vsub.f32 %v620, %v768
      %v801 = vsub.f32 %v625, %v769
      %v802 = vsub.f32 %v630, %v770
      %v803 = vsub.f32 %v635, %v771
      %v804 = vsub.f32 %v640, %v772
      %v805 = vmul.f32 %v773, %v773
      %v806 = vmul.f32 %v774, %v774
      %v807 = vmul.f32 %v775, %v775
      %v808 = vmul.f32 %v776, %v776
      %v809 = vmul.f32 %v777, %v777
      %v810 = vmul.f32 %v778, %v778
      %v811 = vmul.f32 %v779, %v779
      %v812 = vmul.f32 %v780, %v780
      %v813 = vmul.f32 %v781, %v781
      %v814 = vmul.f32 %v782, %v782
      %v815 = vmul.f32 %v783, %v783
      %v816 = vmul.f32 %v784, %v784
      %v817 = vmul.f32 %v785, %v785
      %v818 = vmul.f32 %v786, %v786
      %v819 = vmul.f32 %v787, %v787
      %v820 = vmul.f32 %v788, %v788
      %v821 = vmul.f32 %v789, %v789
      %v822 = vmul.f32 %v790, %v790
      %v823 = vmul.f32 %v791, %v791
      %v824 = vmul.f32 %v792, %v792
      %v825 = vmul.f32 %v793, %v793
      %v826 = vmul.f32 %v794, %v794
      %v827 = vmul.f32 %v795, %v795
      %v828 = vmul.f32 %v796, %v796
      %v829 = vmul.f32 %v797, %v797
      %v830 = vmul.f32 %v798, %v798
      %v831 = vmul.f32 %v799, %v799
      %v832 = vmul.f32 %v800, %v800
      %v833 = vmul.f32 %v801, %v801
      %v834 = vmul.f32 %v802, %v802
      %v835 = vmul.f32 %v803, %v803
      %v836 = vmul.f32 %v804, %v804
      %v837 = vsel %vm643, %v805, 0.0
      %838 = vadd.xlane.f32.xlu0 %v837
      %v839 = vpop.xlane.xlu0 %838
      %v840 = vsel %vm643, %v806, 0.0
      %841 = vadd.xlane.f32.xlu0 %v840
      %v842 = vpop.xlane.xlu0 %841
      %v843 = vsel %vm643, %v807, 0.0
      %844 = vadd.xlane.f32.xlu0 %v843
      %v845 = vpop.xlane.xlu0 %844
      %v846 = vsel %vm643, %v808, 0.0
      %847 = vadd.xlane.f32.xlu0 %v846
      %v848 = vpop.xlane.xlu0 %847
      %v849 = vsel %vm643, %v809, 0.0
      %850 = vadd.xlane.f32.xlu0 %v849
      %v851 = vpop.xlane.xlu0 %850
      %v852 = vsel %vm643, %v810, 0.0
      %853 = vadd.xlane.f32.xlu0 %v852
      %v854 = vpop.xlane.xlu0 %853
      %v855 = vsel %vm643, %v811, 0.0
      %856 = vadd.xlane.f32.xlu0 %v855
      %v857 = vpop.xlane.xlu0 %856
      %v858 = vsel %vm643, %v812, 0.0
      %859 = vadd.xlane.f32.xlu0 %v858
      %v860 = vpop.xlane.xlu0 %859
      %v861 = vsel %vm643, %v813, 0.0
      %862 = vadd.xlane.f32.xlu0 %v861
      %v863 = vpop.xlane.xlu0 %862
      %v864 = vsel %vm643, %v814, 0.0
      %865 = vadd.xlane.f32.xlu0 %v864
      %v866 = vpop.xlane.xlu0 %865
      %v867 = vsel %vm643, %v815, 0.0
      %868 = vadd.xlane.f32.xlu0 %v867
      %v869 = vpop.xlane.xlu0 %868
      %v870 = vsel %vm643, %v816, 0.0
      %871 = vadd.xlane.f32.xlu0 %v870
      %v872 = vpop.xlane.xlu0 %871
      %v873 = vsel %vm643, %v817, 0.0
      %874 = vadd.xlane.f32.xlu0 %v873
      %v875 = vpop.xlane.xlu0 %874
      %v876 = vsel %vm643, %v818, 0.0
      %877 = vadd.xlane.f32.xlu0 %v876
      %v878 = vpop.xlane.xlu0 %877
      %v879 = vsel %vm643, %v819, 0.0
      %880 = vadd.xlane.f32.xlu0 %v879
      %v881 = vpop.xlane.xlu0 %880
      %v882 = vsel %vm643, %v820, 0.0
      %883 = vadd.xlane.f32.xlu0 %v882
      %v884 = vpop.xlane.xlu0 %883
      %v885 = vsel %vm643, %v821, 0.0
      %886 = vadd.xlane.f32.xlu0 %v885
      %v887 = vpop.xlane.xlu0 %886
      %v888 = vsel %vm643, %v822, 0.0
      %889 = vadd.xlane.f32.xlu0 %v888
      %v890 = vpop.xlane.xlu0 %889
      %v891 = vsel %vm643, %v823, 0.0
      %892 = vadd.xlane.f32.xlu0 %v891
      %v893 = vpop.xlane.xlu0 %892
      %v894 = vsel %vm643, %v824, 0.0
      %895 = vadd.xlane.f32.xlu0 %v894
      %v896 = vpop.xlane.xlu0 %895
      %v897 = vsel %vm643, %v825, 0.0
      %898 = vadd.xlane.f32.xlu0 %v897
      %v899 = vpop.xlane.xlu0 %898
      %v900 = vsel %vm643, %v826, 0.0
      %901 = vadd.xlane.f32.xlu0 %v900
      %v902 = vpop.xlane.xlu0 %901
      %v903 = vsel %vm643, %v827, 0.0
      %904 = vadd.xlane.f32.xlu0 %v903
      %v905 = vpop.xlane.xlu0 %904
      %v906 = vsel %vm643, %v828, 0.0
      %907 = vadd.xlane.f32.xlu0 %v906
      %v908 = vpop.xlane.xlu0 %907
      %v909 = vsel %vm643, %v829, 0.0
      %910 = vadd.xlane.f32.xlu0 %v909
      %v911 = vpop.xlane.xlu0 %910
      %v912 = vsel %vm643, %v830, 0.0
      %913 = vadd.xlane.f32.xlu0 %v912
      %v914 = vpop.xlane.xlu0 %913
      %v915 = vsel %vm643, %v831, 0.0
      %916 = vadd.xlane.f32.xlu0 %v915
      %v917 = vpop.xlane.xlu0 %916
      %v918 = vsel %vm643, %v832, 0.0
      %919 = vadd.xlane.f32.xlu0 %v918
      %v920 = vpop.xlane.xlu0 %919
      %v921 = vsel %vm643, %v833, 0.0
      %922 = vadd.xlane.f32.xlu0 %v921
      %v923 = vpop.xlane.xlu0 %922
      %v924 = vsel %vm643, %v834, 0.0
      %925 = vadd.xlane.f32.xlu0 %v924
      %v926 = vpop.xlane.xlu0 %925
      %v927 = vsel %vm643, %v835, 0.0
      %928 = vadd.xlane.f32.xlu0 %v927
      %v929 = vpop.xlane.xlu0 %928
      %v930 = vsel %vm643, %v836, 0.0
      %931 = vadd.xlane.f32.xlu0 %v930
      %v932 = vpop.xlane.xlu0 %931
      %v933 = vmul.f32 %v839, %v740
      %v934 = vmul.f32 %v842, %v740
      %v935 = vmul.f32 %v845, %v740
      %v936 = vmul.f32 %v848, %v740
      %v937 = vmul.f32 %v851, %v740
      %v938 = vmul.f32 %v854, %v740
      %v939 = vmul.f32 %v857, %v740
      %v940 = vmul.f32 %v860, %v740
      %v941 = vmul.f32 %v863, %v740
      %v942 = vmul.f32 %v866, %v740
      %v943 = vmul.f32 %v869, %v740
      %v944 = vmul.f32 %v872, %v740
      %v945 = vmul.f32 %v875, %v740
      %v946 = vmul.f32 %v878, %v740
      %v947 = vmul.f32 %v881, %v740
      %v948 = vmul.f32 %v884, %v740
      %v949 = vmul.f32 %v887, %v740
      %v950 = vmul.f32 %v890, %v740
      %v951 = vmul.f32 %v893, %v740
      %v952 = vmul.f32 %v896, %v740
      %v953 = vmul.f32 %v899, %v740
      %v954 = vmul.f32 %v902, %v740
      %v955 = vmul.f32 %v905, %v740
      %v956 = vmul.f32 %v908, %v740
      %v957 = vmul.f32 %v911, %v740
      %v958 = vmul.f32 %v914, %v740
      %v959 = vmul.f32 %v917, %v740
      %v960 = vmul.f32 %v920, %v740
      %v961 = vmul.f32 %v923, %v740
      %v962 = vmul.f32 %v926, %v740
      %v963 = vmul.f32 %v929, %v740
      %v964 = vmul.f32 %v932, %v740
      %v965 = vadd.f32 %v933, 1e-05
      %v966 = vadd.f32 %v934, 1e-05
      %v967 = vadd.f32 %v935, 1e-05
      %v968 = vadd.f32 %v936, 1e-05
      %v969 = vadd.f32 %v937, 1e-05
      %v970 = vadd.f32 %v938, 1e-05
      %v971 = vadd.f32 %v939, 1e-05
      %v972 = vadd.f32 %v940, 1e-05
      %v973 = vadd.f32 %v941, 1e-05
      %v974 = vadd.f32 %v942, 1e-05
      %v975 = vadd.f32 %v943, 1e-05
      %v976 = vadd.f32 %v944, 1e-05
      %v977 = vadd.f32 %v945, 1e-05
      %v978 = vadd.f32 %v946, 1e-05
      %v979 = vadd.f32 %v947, 1e-05
      %v980 = vadd.f32 %v948, 1e-05
      %v981 = vadd.f32 %v949, 1e-05
      %v982 = vadd.f32 %v950, 1e-05
      %v983 = vadd.f32 %v951, 1e-05
      %v984 = vadd.f32 %v952, 1e-05
      %v985 = vadd.f32 %v953, 1e-05
      %v986 = vadd.f32 %v954, 1e-05
      %v987 = vadd.f32 %v955, 1e-05
      %v988 = vadd.f32 %v956, 1e-05
      %v989 = vadd.f32 %v957, 1e-05
      %v990 = vadd.f32 %v958, 1e-05
      %v991 = vadd.f32 %v959, 1e-05
      %v992 = vadd.f32 %v960, 1e-05
      %v993 = vadd.f32 %v961, 1e-05
      %v994 = vadd.f32 %v962, 1e-05
      %v995 = vadd.f32 %v963, 1e-05
      %v996 = vadd.f32 %v964, 1e-05
      %v997 = vrsqrt.pop %v965
      %v998 = vrsqrt.pop %v966
      %v999 = vrsqrt.pop %v967
      %v1000 = vrsqrt.pop %v968
      %v1001 = vrsqrt.pop %v969
      %v1002 = vrsqrt.pop %v970
      %v1003 = vrsqrt.pop %v971
      %v1004 = vrsqrt.pop %v972
      %v1005 = vrsqrt.pop %v973
      %v1006 = vrsqrt.pop %v974
      %v1007 = vrsqrt.pop %v975
      %v1008 = vrsqrt.pop %v976
      %v1009 = vrsqrt.pop %v977
      %v1010 = vrsqrt.pop %v978
      %v1011 = vrsqrt.pop %v979
      %v1012 = vrsqrt.pop %v980
      %v1013 = vrsqrt.pop %v981
      %v1014 = vrsqrt.pop %v982
      %v1015 = vrsqrt.pop %v983
      %v1016 = vrsqrt.pop %v984
      %v1017 = vrsqrt.pop %v985
      %v1018 = vrsqrt.pop %v986
      %v1019 = vrsqrt.pop %v987
      %v1020 = vrsqrt.pop %v988
      %v1021 = vrsqrt.pop %v989
      %v1022 = vrsqrt.pop %v990
      %v1023 = vrsqrt.pop %v991
      %v1024 = vrsqrt.pop %v992
      %v1025 = vrsqrt.pop %v993
      %v1026 = vrsqrt.pop %v994
      %v1027 = vrsqrt.pop %v995
      %v1028 = vrsqrt.pop %v996
      %v1029 = vmul.f32 %v773, %v997
      %v1030 = vmul.f32 %v774, %v998
      %v1031 = vmul.f32 %v775, %v999
      %v1032 = vmul.f32 %v776, %v1000
      %v1033 = vmul.f32 %v777, %v1001
      %v1034 = vmul.f32 %v778, %v1002
      %v1035 = vmul.f32 %v779, %v1003
      %v1036 = vmul.f32 %v780, %v1004
      %v1037 = vmul.f32 %v781, %v1005
      %v1038 = vmul.f32 %v782, %v1006
      %v1039 = vmul.f32 %v783, %v1007
      %v1040 = vmul.f32 %v784, %v1008
      %v1041 = vmul.f32 %v785, %v1009
      %v1042 = vmul.f32 %v786, %v1010
      %v1043 = vmul.f32 %v787, %v1011
      %v1044 = vmul.f32 %v788, %v1012
      %v1045 = vmul.f32 %v789, %v1013
      %v1046 = vmul.f32 %v790, %v1014
      %v1047 = vmul.f32 %v791, %v1015
      %v1048 = vmul.f32 %v792, %v1016
      %v1049 = vmul.f32 %v793, %v1017
      %v1050 = vmul.f32 %v794, %v1018
      %v1051 = vmul.f32 %v795, %v1019
      %v1052 = vmul.f32 %v796, %v1020
      %v1053 = vmul.f32 %v797, %v1021
      %v1054 = vmul.f32 %v798, %v1022
      %v1055 = vmul.f32 %v799, %v1023
      %v1056 = vmul.f32 %v800, %v1024
      %v1057 = vmul.f32 %v801, %v1025
      %v1058 = vmul.f32 %v802, %v1026
      %v1059 = vmul.f32 %v803, %v1027
      %v1060 = vmul.f32 %v804, %v1028
      %v1061 = vld [vmem:[%s2] sm:$0x1]
      %v1063 = vlaneseq
      %v1064 = vshrl.u32 %v1063, 7
      %v1065 = vsub.s32 0, %v1064
      %v1066 = vrot.slane %v1061, %v1065
      %v1068 = vmul.f32 %v1029, %v1066
      %v1069 = vmul.f32 %v1030, %v1066
      %v1070 = vmul.f32 %v1031, %v1066
      %v1071 = vmul.f32 %v1032, %v1066
      %v1072 = vmul.f32 %v1033, %v1066
      %v1073 = vmul.f32 %v1034, %v1066
      %v1074 = vmul.f32 %v1035, %v1066
      %v1075 = vmul.f32 %v1036, %v1066
      %v1076 = vmul.f32 %v1037, %v1066
      %v1077 = vmul.f32 %v1038, %v1066
      %v1078 = vmul.f32 %v1039, %v1066
      %v1079 = vmul.f32 %v1040, %v1066
      %v1080 = vmul.f32 %v1041, %v1066
      %v1081 = vmul.f32 %v1042, %v1066
      %v1082 = vmul.f32 %v1043, %v1066
      %v1083 = vmul.f32 %v1044, %v1066
      %v1084 = vmul.f32 %v1045, %v1066
      %v1085 = vmul.f32 %v1046, %v1066
      %v1086 = vmul.f32 %v1047, %v1066
      %v1087 = vmul.f32 %v1048, %v1066
      %v1088 = vmul.f32 %v1049, %v1066
      %v1089 = vmul.f32 %v1050, %v1066
      %v1090 = vmul.f32 %v1051, %v1066
      %v1091 = vmul.f32 %v1052, %v1066
      %v1092 = vmul.f32 %v1053, %v1066
      %v1093 = vmul.f32 %v1054, %v1066
      %v1094 = vmul.f32 %v1055, %v1066
      %v1095 = vmul.f32 %v1056, %v1066
      %v1096 = vmul.f32 %v1057, %v1066
      %v1097 = vmul.f32 %v1058, %v1066
      %v1098 = vmul.f32 %v1059, %v1066
      %v1099 = vmul.f32 %v1060, %v1066
      %v1100 = vld [vmem:[%s3] sm:$0x1]
      %v1102 = vlaneseq
      %v1103 = vshrl.u32 %v1102, 7
      %v1104 = vsub.s32 0, %v1103
      %v1105 = vrot.slane %v1100, %v1104
      %v1107 = vadd.f32 %v1068, %v1105
      %v1108 = vadd.f32 %v1069, %v1105
      %v1109 = vadd.f32 %v1070, %v1105
      %v1110 = vadd.f32 %v1071, %v1105
      %v1111 = vadd.f32 %v1072, %v1105
      %v1112 = vadd.f32 %v1073, %v1105
      %v1113 = vadd.f32 %v1074, %v1105
      %v1114 = vadd.f32 %v1075, %v1105
      %v1115 = vadd.f32 %v1076, %v1105
      %v1116 = vadd.f32 %v1077, %v1105
      %v1117 = vadd.f32 %v1078, %v1105
      %v1118 = vadd.f32 %v1079, %v1105
      %v1119 = vadd.f32 %v1080, %v1105
      %v1120 = vadd.f32 %v1081, %v1105
      %v1121 = vadd.f32 %v1082, %v1105
      %v1122 = vadd.f32 %v1083, %v1105
      %v1123 = vadd.f32 %v1084, %v1105
      %v1124 = vadd.f32 %v1085, %v1105
      %v1125 = vadd.f32 %v1086, %v1105
      %v1126 = vadd.f32 %v1087, %v1105
      %v1127 = vadd.f32 %v1088, %v1105
      %v1128 = vadd.f32 %v1089, %v1105
      %v1129 = vadd.f32 %v1090, %v1105
      %v1130 = vadd.f32 %v1091, %v1105
      %v1131 = vadd.f32 %v1092, %v1105
      %v1132 = vadd.f32 %v1093, %v1105
      %v1133 = vadd.f32 %v1094, %v1105
      %v1134 = vadd.f32 %v1095, %v1105
      %v1135 = vadd.f32 %v1096, %v1105
      %v1136 = vadd.f32 %v1097, %v1105
      %v1137 = vadd.f32 %v1098, %v1105
      %v1138 = vadd.f32 %v1099, %v1105
      %v1139 = vld [vmem:[%s4] sm:$0xff]
      %v1140 = vld [vmem:[%s4 + $0x8] sm:$0xff]
      %v1141 = vld [vmem:[%s4 + $0x10] sm:$0xff]
      %v1142 = vld [vmem:[%s4 + $0x18] sm:$0xff]
      %v1143 = vld [vmem:[#allocation2] sm:$0x1]
      %s1144 = vtos %v1143
      %v1145 = vld [vmem:[%s5] sm:$0xff]
      %v1146 = vld [vmem:[%s5 + $0x8] sm:$0xff]
      %v1147 = vld [vmem:[%s5 + $0x10] sm:$0xff]
      %v1148 = vld [vmem:[%s5 + $0x18] sm:$0xff]
      %v1149 = vld [vmem:[%s5 + $0x20] sm:$0xff]
      %v1150 = vld [vmem:[%s5 + $0x28] sm:$0xff]
      %v1151 = vld [vmem:[%s5 + $0x30] sm:$0xff]
      %v1152 = vld [vmem:[%s5 + $0x38] sm:$0xff]
      %v1153 = vld [vmem:[%s5 + $0x40] sm:$0xff]
      %v1154 = vld [vmem:[%s5 + $0x48] sm:$0xff]
      %v1155 = vld [vmem:[%s5 + $0x50] sm:$0xff]
      %v1156 = vld [vmem:[%s5 + $0x58] sm:$0xff]
      %v1157 = vld [vmem:[%s5 + $0x60] sm:$0xff]
      %v1158 = vld [vmem:[%s5 + $0x68] sm:$0xff]
      %v1159 = vld [vmem:[%s5 + $0x70] sm:$0xff]
      %v1160 = vld [vmem:[%s5 + $0x78] sm:$0xff]
      %v1161 = vld [vmem:[%s5 + $0x80] sm:$0xff]
      %v1162 = vld [vmem:[%s5 + $0x88] sm:$0xff]
      %v1163 = vld [vmem:[%s5 + $0x90] sm:$0xff]
      %v1164 = vld [vmem:[%s5 + $0x98] sm:$0xff]
      %v1165 = vld [vmem:[%s5 + $0xa0] sm:$0xff]
      %v1166 = vld [vmem:[%s5 + $0xa8] sm:$0xff]
      %v1167 = vld [vmem:[%s5 + $0xb0] sm:$0xff]
      %v1168 = vld [vmem:[%s5 + $0xb8] sm:$0xff]
      %v1169 = vld [vmem:[%s5 + $0xc0] sm:$0xff]
      %v1170 = vld [vmem:[%s5 + $0xc8] sm:$0xff]
      %v1171 = vld [vmem:[%s5 + $0xd0] sm:$0xff]
      %v1172 = vld [vmem:[%s5 + $0xd8] sm:$0xff]
      %v1173 = vld [vmem:[%s5 + $0xe0] sm:$0xff]
      %v1174 = vld [vmem:[%s5 + $0xe8] sm:$0xff]
      %v1175 = vld [vmem:[%s5 + $0xf0] sm:$0xff]
      %v1176 = vld [vmem:[%s5 + $0xf8] sm:$0xff]
      %v1177 = vstv %s1144
      %v1178 = vmul.f32 %v1177, %v1145
      %v1179 = vmul.f32 %v1177, %v1146
      %v1180 = vmul.f32 %v1177, %v1147
      %v1181 = vmul.f32 %v1177, %v1148
      %v1182 = vmul.f32 %v1177, %v1149
      %v1183 = vmul.f32 %v1177, %v1150
      %v1184 = vmul.f32 %v1177, %v1151
      %v1185 = vmul.f32 %v1177, %v1152
      %v1186 = vmul.f32 %v1177, %v1153
      %v1187 = vmul.f32 %v1177, %v1154
      %v1188 = vmul.f32 %v1177, %v1155
      %v1189 = vmul.f32 %v1177, %v1156
      %v1190 = vmul.f32 %v1177, %v1157
      %v1191 = vmul.f32 %v1177, %v1158
      %v1192 = vmul.f32 %v1177, %v1159
      %v1193 = vmul.f32 %v1177, %v1160
      %v1194 = vmul.f32 %v1177, %v1161
      %v1195 = vmul.f32 %v1177, %v1162
      %v1196 = vmul.f32 %v1177, %v1163
      %v1197 = vmul.f32 %v1177, %v1164
      %v1198 = vmul.f32 %v1177, %v1165
      %v1199 = vmul.f32 %v1177, %v1166
      %v1200 = vmul.f32 %v1177, %v1167
      %v1201 = vmul.f32 %v1177, %v1168
      %v1202 = vmul.f32 %v1177, %v1169
      %v1203 = vmul.f32 %v1177, %v1170
      %v1204 = vmul.f32 %v1177, %v1171
      %v1205 = vmul.f32 %v1177, %v1172
      %v1206 = vmul.f32 %v1177, %v1173
      %v1207 = vmul.f32 %v1177, %v1174
      %v1208 = vmul.f32 %v1177, %v1175
      %v1209 = vmul.f32 %v1177, %v1176
      %v1211 = vsel %vm643, %v1107, 0
      %v1214 = vsel %vm643, %v1108, 0
      %v1217 = vsel %vm643, %v1109, 0
      %v1220 = vsel %vm643, %v1110, 0
      %v1223 = vsel %vm643, %v1111, 0
      %v1226 = vsel %vm643, %v1112, 0
      %v1229 = vsel %vm643, %v1113, 0
      %v1232 = vsel %vm643, %v1114, 0
      %v1235 = vsel %vm643, %v1115, 0
      %v1238 = vsel %vm643, %v1116, 0
      %v1241 = vsel %vm643, %v1117, 0
      %v1244 = vsel %vm643, %v1118, 0
      %v1247 = vsel %vm643, %v1119, 0
      %v1250 = vsel %vm643, %v1120, 0
      %v1253 = vsel %vm643, %v1121, 0
      %v1256 = vsel %vm643, %v1122, 0
      %v1259 = vsel %vm643, %v1123, 0
      %v1262 = vsel %vm643, %v1124, 0
      %v1265 = vsel %vm643, %v1125, 0
      %v1268 = vsel %vm643, %v1126, 0
      %v1271 = vsel %vm643, %v1127, 0
      %v1274 = vsel %vm643, %v1128, 0
      %v1277 = vsel %vm643, %v1129, 0
      %v1280 = vsel %vm643, %v1130, 0
      %v1283 = vsel %vm643, %v1131, 0
      %v1286 = vsel %vm643, %v1132, 0
      %v1289 = vsel %vm643, %v1133, 0
      %v1292 = vsel %vm643, %v1134, 0
      %v1295 = vsel %vm643, %v1135, 0
      %v1298 = vsel %vm643, %v1136, 0
      %v1301 = vsel %vm643, %v1137, 0
      %v1304 = vsel %vm643, %v1138, 0
      %1306 = vmatprep.subr.mxu0 0.0
      %1307 = vmatpush1.msra.mxu0 0.0
      %1308 = vmatprep.subr.mxu0 0.0
      %1309 = vmatpush1.msra.mxu0 0.0
      %1310 = vmatprep.subr.mxu0 0.0
      %1311 = vmatpush1.msra.mxu0 0.0
      %1312 = vmatprep.subr.mxu0 0.0
      %1313 = vmatpush1.msra.mxu0 0.0
      %1314 = vmatprep.subr.mxu0 0.0
      %1315 = vmatpush1.msra.mxu0 0.0
      %1316 = vmatprep.subr.mxu0 0.0
      %1317 = vmatpush1.msra.mxu0 0.0
      %1318 = vmatprep.subr.mxu0 0.0
      %1319 = vmatpush1.msra.mxu0 0.0
      %1320 = vmatprep.subr.mxu0 0.0
      %1321 = vmatpush1.msra.mxu0 0.0
      %1322 = vmatprep.subr.mxu0 0.0
      %1323 = vmatpush1.msra.mxu0 0.0
      %1324 = vmatprep.subr.mxu0 0.0
      %1325 = vmatpush1.msra.mxu0 0.0
      %1326 = vmatprep.subr.mxu0 0.0
      %1327 = vmatpush1.msra.mxu0 0.0
      %1328 = vmatprep.subr.mxu0 0.0
      %1329 = vmatpush1.msra.mxu0 0.0
      %1330 = vmatprep.subr.mxu0 0.0
      %1331 = vmatpush1.msra.mxu0 %v1142
      %1332 = vmatprep.subr.mxu0 0.0
      %1333 = vmatpush1.msra.mxu0 %v1141
      %1334 = vmatprep.subr.mxu0 0.0
      %1335 = vmatpush1.msra.mxu0 %v1140
      %1336 = vmatprep.subr.mxu0 0.0
      %1337 = vmatpush1.msra.mxu0 %v1139
      %1338 = vmatprep.subr.mxu0 0.0
      %1339 = vmatpush2.msra.mxu0 0.0
      %1340 = vmatprep.subr.mxu0 0.0
      %1341 = vmatpush2.msra.mxu0 0.0
      %1342 = vmatprep.subr.mxu0 0.0
      %1343 = vmatpush2.msra.mxu0 0.0
      %1344 = vmatprep.subr.mxu0 0.0
      %1345 = vmatpush2.msra.mxu0 0.0
      %1346 = vmatprep.subr.mxu0 0.0
      %1347 = vmatpush2.msra.mxu0 0.0
      %1348 = vmatprep.subr.mxu0 0.0
      %1349 = vmatpush2.msra.mxu0 0.0
      %1350 = vmatprep.subr.mxu0 0.0
      %1351 = vmatpush2.msra.mxu0 0.0
      %1352 = vmatprep.subr.mxu0 0.0
      %1353 = vmatpush2.msra.mxu0 0.0
      %1354 = vmatprep.subr.mxu0 0.0
      %1355 = vmatpush2.msra.mxu0 0.0
      %1356 = vmatprep.subr.mxu0 0.0
      %1357 = vmatpush2.msra.mxu0 0.0
      %1358 = vmatprep.subr.mxu0 0.0
      %1359 = vmatpush2.msra.mxu0 0.0
      %1360 = vmatprep.subr.mxu0 0.0
      %1361 = vmatpush2.msra.mxu0 0.0
      %1362 = vmatprep.subr.mxu0 0.0
      %1363 = vmatpush2.msra.mxu0 0.0
      %1364 = vmatprep.subr.mxu0 0.0
      %1365 = vmatpush2.msra.mxu0 0.0
      %1366 = vmatprep.subr.mxu0 0.0
      %1367 = vmatpush2.msra.mxu0 0.0
      %1368 = vmatprep.subr.mxu0 0.0
      %1369 = vmatpush2.msra.mxu0 0.0
      %1370 = vmatprep.mubr.f32.mxu0 0.0
      %1371 = vmatmul.mubr.f32.gmra.mxu0 %v1211
      %v1372 = vpop.f32.mrf.mxu0
      %v1373 = vadd.f32 %v1178, %v1372
      %v1374 = vpop.f32.mrf.mxu0
      %1375 = vmatprep.mubr.f32.mxu0 0.0
      %1376 = vmatmul.mubr.f32.gmra.mxu0 %v1214
      %v1377 = vpop.f32.mrf.mxu0
      %v1378 = vadd.f32 %v1179, %v1377
      %v1379 = vpop.f32.mrf.mxu0
      %1380 = vmatprep.mubr.f32.mxu0 0.0
      %1381 = vmatmul.mubr.f32.gmra.mxu0 %v1217
      %v1382 = vpop.f32.mrf.mxu0
      %v1383 = vadd.f32 %v1180, %v1382
      %v1384 = vpop.f32.mrf.mxu0
      %1385 = vmatprep.mubr.f32.mxu0 0.0
      %1386 = vmatmul.mubr.f32.gmra.mxu0 %v1220
      %v1387 = vpop.f32.mrf.mxu0
      %v1388 = vadd.f32 %v1181, %v1387
      %v1389 = vpop.f32.mrf.mxu0
      %1390 = vmatprep.mubr.f32.mxu0 0.0
      %1391 = vmatmul.mubr.f32.gmra.mxu0 %v1223
      %v1392 = vpop.f32.mrf.mxu0
      %v1393 = vadd.f32 %v1182, %v1392
      %v1394 = vpop.f32.mrf.mxu0
      %1395 = vmatprep.mubr.f32.mxu0 0.0
      %1396 = vmatmul.mubr.f32.gmra.mxu0 %v1226
      %v1397 = vpop.f32.mrf.mxu0
      %v1398 = vadd.f32 %v1183, %v1397
      %v1399 = vpop.f32.mrf.mxu0
      %1400 = vmatprep.mubr.f32.mxu0 0.0
      %1401 = vmatmul.mubr.f32.gmra.mxu0 %v1229
      %v1402 = vpop.f32.mrf.mxu0
      %v1403 = vadd.f32 %v1184, %v1402
      %v1404 = vpop.f32.mrf.mxu0
      %1405 = vmatprep.mubr.f32.mxu0 0.0
      %1406 = vmatmul.mubr.f32.gmra.mxu0 %v1232
      %v1407 = vpop.f32.mrf.mxu0
      %v1408 = vadd.f32 %v1185, %v1407
      %v1409 = vpop.f32.mrf.mxu0
      %1410 = vmatprep.mubr.f32.mxu0 0.0
      %1411 = vmatmul.mubr.f32.gmra.mxu0 %v1235
      %v1412 = vpop.f32.mrf.mxu0
      %v1413 = vadd.f32 %v1186, %v1412
      %v1414 = vpop.f32.mrf.mxu0
      %1415 = vmatprep.mubr.f32.mxu0 0.0
      %1416 = vmatmul.mubr.f32.gmra.mxu0 %v1238
      %v1417 = vpop.f32.mrf.mxu0
      %v1418 = vadd.f32 %v1187, %v1417
      %v1419 = vpop.f32.mrf.mxu0
      %1420 = vmatprep.mubr.f32.mxu0 0.0
      %1421 = vmatmul.mubr.f32.gmra.mxu0 %v1241
      %v1422 = vpop.f32.mrf.mxu0
      %v1423 = vadd.f32 %v1188, %v1422
      %v1424 = vpop.f32.mrf.mxu0
      %1425 = vmatprep.mubr.f32.mxu0 0.0
      %1426 = vmatmul.mubr.f32.gmra.mxu0 %v1244
      %v1427 = vpop.f32.mrf.mxu0
      %v1428 = vadd.f32 %v1189, %v1427
      %v1429 = vpop.f32.mrf.mxu0
      %1430 = vmatprep.mubr.f32.mxu0 0.0
      %1431 = vmatmul.mubr.f32.gmra.mxu0 %v1247
      %v1432 = vpop.f32.mrf.mxu0
      %v1433 = vadd.f32 %v1190, %v1432
      %v1434 = vpop.f32.mrf.mxu0
      %1435 = vmatprep.mubr.f32.mxu0 0.0
      %1436 = vmatmul.mubr.f32.gmra.mxu0 %v1250
      %v1437 = vpop.f32.mrf.mxu0
      %v1438 = vadd.f32 %v1191, %v1437
      %v1439 = vpop.f32.mrf.mxu0
      %1440 = vmatprep.mubr.f32.mxu0 0.0
      %1441 = vmatmul.mubr.f32.gmra.mxu0 %v1253
      %v1442 = vpop.f32.mrf.mxu0
      %v1443 = vadd.f32 %v1192, %v1442
      %v1444 = vpop.f32.mrf.mxu0
      %1445 = vmatprep.mubr.f32.mxu0 0.0
      %1446 = vmatmul.mubr.f32.gmra.mxu0 %v1256
      %v1447 = vpop.f32.mrf.mxu0
      %v1448 = vadd.f32 %v1193, %v1447
      %v1449 = vpop.f32.mrf.mxu0
      %1450 = vmatprep.mubr.f32.mxu0 0.0
      %1451 = vmatmul.mubr.f32.gmra.mxu0 %v1259
      %v1452 = vpop.f32.mrf.mxu0
      %v1453 = vadd.f32 %v1194, %v1452
      %v1454 = vpop.f32.mrf.mxu0
      %1455 = vmatprep.mubr.f32.mxu0 0.0
      %1456 = vmatmul.mubr.f32.gmra.mxu0 %v1262
      %v1457 = vpop.f32.mrf.mxu0
      %v1458 = vadd.f32 %v1195, %v1457
      %v1459 = vpop.f32.mrf.mxu0
      %1460 = vmatprep.mubr.f32.mxu0 0.0
      %1461 = vmatmul.mubr.f32.gmra.mxu0 %v1265
      %v1462 = vpop.f32.mrf.mxu0
      %v1463 = vadd.f32 %v1196, %v1462
      %v1464 = vpop.f32.mrf.mxu0
      %1465 = vmatprep.mubr.f32.mxu0 0.0
      %1466 = vmatmul.mubr.f32.gmra.mxu0 %v1268
      %v1467 = vpop.f32.mrf.mxu0
      %v1468 = vadd.f32 %v1197, %v1467
      %v1469 = vpop.f32.mrf.mxu0
      %1470 = vmatprep.mubr.f32.mxu0 0.0
      %1471 = vmatmul.mubr.f32.gmra.mxu0 %v1271
      %v1472 = vpop.f32.mrf.mxu0
      %v1473 = vadd.f32 %v1198, %v1472
      %v1474 = vpop.f32.mrf.mxu0
      %1475 = vmatprep.mubr.f32.mxu0 0.0
      %1476 = vmatmul.mubr.f32.gmra.mxu0 %v1274
      %v1477 = vpop.f32.mrf.mxu0
      %v1478 = vadd.f32 %v1199, %v1477
      %v1479 = vpop.f32.mrf.mxu0
      %1480 = vmatprep.mubr.f32.mxu0 0.0
      %1481 = vmatmul.mubr.f32.gmra.mxu0 %v1277
      %v1482 = vpop.f32.mrf.mxu0
      %v1483 = vadd.f32 %v1200, %v1482
      %v1484 = vpop.f32.mrf.mxu0
      %1485 = vmatprep.mubr.f32.mxu0 0.0
      %1486 = vmatmul.mubr.f32.gmra.mxu0 %v1280
      %v1487 = vpop.f32.mrf.mxu0
      %v1488 = vadd.f32 %v1201, %v1487
      %v1489 = vpop.f32.mrf.mxu0
      %1490 = vmatprep.mubr.f32.mxu0 0.0
      %1491 = vmatmul.mubr.f32.gmra.mxu0 %v1283
      %v1492 = vpop.f32.mrf.mxu0
      %v1493 = vadd.f32 %v1202, %v1492
      %v1494 = vpop.f32.mrf.mxu0
      %1495 = vmatprep.mubr.f32.mxu0 0.0
      %1496 = vmatmul.mubr.f32.gmra.mxu0 %v1286
      %v1497 = vpop.f32.mrf.mxu0
      %v1498 = vadd.f32 %v1203, %v1497
      %v1499 = vpop.f32.mrf.mxu0
      %1500 = vmatprep.mubr.f32.mxu0 0.0
      %1501 = vmatmul.mubr.f32.gmra.mxu0 %v1289
      %v1502 = vpop.f32.mrf.mxu0
      %v1503 = vadd.f32 %v1204, %v1502
      %v1504 = vpop.f32.mrf.mxu0
      %1505 = vmatprep.mubr.f32.mxu0 0.0
      %1506 = vmatmul.mubr.f32.gmra.mxu0 %v1292
      %v1507 = vpop.f32.mrf.mxu0
      %v1508 = vadd.f32 %v1205, %v1507
      %v1509 = vpop.f32.mrf.mxu0
      %1510 = vmatprep.mubr.f32.mxu0 0.0
      %1511 = vmatmul.mubr.f32.gmra.mxu0 %v1295
      %v1512 = vpop.f32.mrf.mxu0
      %v1513 = vadd.f32 %v1206, %v1512
      %v1514 = vpop.f32.mrf.mxu0
      %1515 = vmatprep.mubr.f32.mxu0 0.0
      %1516 = vmatmul.mubr.f32.gmra.mxu0 %v1298
      %v1517 = vpop.f32.mrf.mxu0
      %v1518 = vadd.f32 %v1207, %v1517
      %v1519 = vpop.f32.mrf.mxu0
      %1520 = vmatprep.mubr.f32.mxu0 0.0
      %1521 = vmatmul.mubr.f32.gmra.mxu0 %v1301
      %v1522 = vpop.f32.mrf.mxu0
      %v1523 = vadd.f32 %v1208, %v1522
      %v1524 = vpop.f32.mrf.mxu0
      %1525 = vmatprep.mubr.f32.mxu0 0.0
      %1526 = vmatmul.mubr.f32.gmra.mxu0 %v1304
      %v1527 = vpop.f32.mrf.mxu0
      %v1528 = vadd.f32 %v1209, %v1527
      %v1529 = vpop.f32.mrf.mxu0
      %1530 = vdwg.mxu0
      %vm1531 = vcmask 130048
      %1532 = vst.msk [vmem:[%s280] sm:$0xff] %vm1531, %v1373
      %1533 = vst.msk [vmem:[%s280 + $0x8] sm:$0xff] %vm1531, %v1378
      %1534 = vst.msk [vmem:[%s280 + $0x10] sm:$0xff] %vm1531, %v1383
      %1535 = vst.msk [vmem:[%s280 + $0x18] sm:$0xff] %vm1531, %v1388
      %1536 = vst.msk [vmem:[%s280 + $0x20] sm:$0xff] %vm1531, %v1393
      %1537 = vst.msk [vmem:[%s280 + $0x28] sm:$0xff] %vm1531, %v1398
      %1538 = vst.msk [vmem:[%s280 + $0x30] sm:$0xff] %vm1531, %v1403
      %1539 = vst.msk [vmem:[%s280 + $0x38] sm:$0xff] %vm1531, %v1408
      %1540 = vst.msk [vmem:[%s280 + $0x40] sm:$0xff] %vm1531, %v1413
      %1541 = vst.msk [vmem:[%s280 + $0x48] sm:$0xff] %vm1531, %v1418
      %1542 = vst.msk [vmem:[%s280 + $0x50] sm:$0xff] %vm1531, %v1423
      %1543 = vst.msk [vmem:[%s280 + $0x58] sm:$0xff] %vm1531, %v1428
      %1544 = vst.msk [vmem:[%s280 + $0x60] sm:$0xff] %vm1531, %v1433
      %1545 = vst.msk [vmem:[%s280 + $0x68] sm:$0xff] %vm1531, %v1438
      %1546 = vst.msk [vmem:[%s280 + $0x70] sm:$0xff] %vm1531, %v1443
      %1547 = vst.msk [vmem:[%s280 + $0x78] sm:$0xff] %vm1531, %v1448
      %1548 = vst.msk [vmem:[%s280 + $0x80] sm:$0xff] %vm1531, %v1453
      %1549 = vst.msk [vmem:[%s280 + $0x88] sm:$0xff] %vm1531, %v1458
      %1550 = vst.msk [vmem:[%s280 + $0x90] sm:$0xff] %vm1531, %v1463
      %1551 = vst.msk [vmem:[%s280 + $0x98] sm:$0xff] %vm1531, %v1468
      %1552 = vst.msk [vmem:[%s280 + $0xa0] sm:$0xff] %vm1531, %v1473
      %1553 = vst.msk [vmem:[%s280 + $0xa8] sm:$0xff] %vm1531, %v1478
      %1554 = vst.msk [vmem:[%s280 + $0xb0] sm:$0xff] %vm1531, %v1483
      %1555 = vst.msk [vmem:[%s280 + $0xb8] sm:$0xff] %vm1531, %v1488
      %1556 = vst.msk [vmem:[%s280 + $0xc0] sm:$0xff] %vm1531, %v1493
      %1557 = vst.msk [vmem:[%s280 + $0xc8] sm:$0xff] %vm1531, %v1498
      %1558 = vst.msk [vmem:[%s280 + $0xd0] sm:$0xff] %vm1531, %v1503
      %1559 = vst.msk [vmem:[%s280 + $0xd8] sm:$0xff] %vm1531, %v1508
      %1560 = vst.msk [vmem:[%s280 + $0xe0] sm:$0xff] %vm1531, %v1513
      %1561 = vst.msk [vmem:[%s280 + $0xe8] sm:$0xff] %vm1531, %v1518
      %1562 = vst.msk [vmem:[%s280 + $0xf0] sm:$0xff] %vm1531, %v1523
      %1563 = vst.msk [vmem:[%s280 + $0xf8] sm:$0xff] %vm1531, %v1528
      %p1564 = scmp.lt.s32.totalorder %s20, 1
      %s1565 = scalar_select %p1564, %s20, 1
      %s1566 = smul.addr %s1565, 32
      %s1567 = smul.addr %s1566, 8
      %s1568 = scalar_lea.vmem %s7, %s1567
      // Predicated region
      $region49: #{bilinear_upsample.1} parent=47 // pred_check
        %p1569 = pneg %p190
      $region50: #{bilinear_upsample.1} parent=47 // pred_check_branch
        %1571 = sbr.rel (%p1569) target = $region52
      $region51: #{bilinear_upsample.1} parent=47 // pred_region
        _
      $region52: #{bilinear_upsample.1} parent=47 // pred_fallthru
        _
    $region48: #{bilinear_upsample.1} parent=5 // pred_fallthru
      _
    %p1572 = scmp.le.s32.totalorder 2, %s15
    // Predicated region
    $region53: #{bilinear_upsample.1} parent=5 // pred_check
      %p1573 = pneg %p1572
    $region54: #{bilinear_upsample.1} parent=5 // pred_check_branch
      %1575 = sbr.rel (%p1573) target = $region56
    $region55: #{bilinear_upsample.1} parent=5 // pred_region
      %s1576 = ssub.s32 %s15, 2
      // Predicated region
      $region57: #{bilinear_upsample.1} parent=55 // pred_check
        %p1577 = pneg %p196
      $region58: #{bilinear_upsample.1} parent=55 // pred_check_branch
        %1579 = sbr.rel (%p1577) target = $region60
      $region59: #{bilinear_upsample.1} parent=55 // pred_region
        %p1580 = scmp.lt.s32.totalorder %s21, 1
        %s1581 = scalar_select %p1580, %s21, 1
        %s1582 = smul.addr %s1581, 32
        %s1583 = smul.addr %s1582, 8
        %s1584 = scalar_lea.vmem %s7, %s1583
      $region60: #{bilinear_upsample.1} parent=55 // pred_fallthru
        _
    $region56: #{bilinear_upsample.1} parent=5 // pred_fallthru
      _
  $region6: #{bilinear_upsample.1} parent=0 // loop_footer
    %s19 = sadd.s32 1, %s15
  $region7: #{bilinear_upsample.1} parent=0 // loop_footer_branch
    %14 = sbr.rel target = $region3
  $region8: #{bilinear_upsample.1} parent=0 // loop_exit
    _

</llo_original>
